<compile_context>
chip_gen: v7x
topology: tpu7x:2x2x1
jax: 0.10.0
libtpu: 0.0.40
codegen_flags: <defaults>
</compile_context>

<pallas_src>
import functools

import jax
import jax.numpy as jnp
from jax.experimental import pallas as pl
from jax.experimental.pallas import tpu as pltpu


def _round_up(x, m):
    return (x + m - 1) // m * m


def _st_kernel(first_ref, last_ref, col_ref, rowc_ref, src_ref, out_ref, acc_ref,
               *, n_out_tiles):
    n = pl.program_id(0)
    j = pl.program_id(1)
    k = pl.program_id(2)

    @pl.when(k == 0)
    def _init():
        acc_ref[...] = jnp.zeros_like(acc_ref)

    t = n * n_out_tiles + j
    in_band = k <= (last_ref[t] - first_ref[t])

    @pl.when(in_band)
    def _accumulate():
        col = col_ref[0]                       # (12, TS_out) packed per-output-column data
        x0 = col[0:1, :]; x1 = col[1:2, :]
        y0 = col[2:3, :]; y1 = col[3:4, :]
        z0 = col[4:5, :]; z1 = col[5:6, :]
        wx0 = col[6:7, :]; wx1 = col[7:8, :]
        wy0 = col[8:9, :]; wy1 = col[9:10, :]
        wz0 = col[10:11, :]; wz1 = col[11:12, :]

        rc = rowc_ref[...]                     # (TS_src, 3) per-source-row (x, y, z)
        ix = rc[:, 0:1]
        iy = rc[:, 1:2]
        iz = rc[:, 2:3]

        # Factorized trilinear one-hot matrix: each axis factor selects the
        # matching corner weight (x0 != x1, so the nested select is exact).
        # Out-of-range corners never match an in-range row coordinate, and
        # their weights were zeroed host-side anyway (no aliasing possible).
        fx = jnp.where(ix == x0, wx0, jnp.where(ix == x1, wx1, 0.0))
        fy = jnp.where(iy == y0, wy0, jnp.where(iy == y1, wy1, 0.0))
        fz = jnp.where(iz == z0, wz0, jnp.where(iz == z1, wz1, 0.0))
        wmat = (fz * fy) * fx                  # (TS_src, TS_out)
        # TODO(synk): further VPU relief via roll-to-XLU one-hot needs halo
        # handling across src-tile boundaries; not implemented.

        src = src_ref[0]                       # (C, TS_src)
        if src.dtype == jnp.bfloat16:
            wmat = wmat.astype(jnp.bfloat16)   # keep MXU in bf16, accumulate in f32
        else:
            src = src.astype(jnp.float32)
        acc_ref[...] += jnp.dot(src, wmat, preferred_element_type=jnp.float32)

    @pl.when(k == pl.num_programs(2) - 1)
    def _writeback():
        out_ref[0] = acc_ref[...].astype(out_ref.dtype)


def spatial_transformer(src, flow, mode="bilinear", *, ts_out=None, ts_src=None):
    """src: (N, C, D, H, W); flow: (N, 3, D, H, W) in normalized grid_sample units
    (channel order x, y, z == W, H, D, matching torch affine_grid/grid_sample)."""
    assert mode == "bilinear"  # TODO(synk): 'nearest' grid_sample mode not implemented
    N, C, D, H, W = src.shape
    assert flow.shape == (N, 3, D, H, W)
    S = D * H * W
    HW = H * W

    if ts_out is None:
        ts_out = min(512, _round_up(S, 128))
    if ts_src is None:
        ts_src = min(512, _round_up(S, 128))
    assert ts_out % 128 == 0 and ts_src % 128 == 0

    S_out_p = _round_up(S, ts_out)
    S_src_p = _round_up(S, ts_src)
    n_out_tiles = S_out_p // ts_out
    n_src_tiles = S_src_p // ts_src
    pad_o = S_out_p - S

    # ----------------- O(S) wrapper prep (all index math in int32) -----------------
    flow_f = flow.reshape(N, 3, S).astype(jnp.float32)

    lin = jnp.arange(S, dtype=jnp.int32)
    w_idx = lin % W
    h_idx = (lin // W) % H
    d_idx = lin // HW

    # identity affine_grid (align_corners=False) + flow, unnormalized:
    #   ((g_axis + flow) + 1) * size / 2 - 0.5  ==  voxel_index + flow * size / 2
    px = w_idx.astype(jnp.float32)[None] + flow_f[:, 0] * (W * 0.5)
    py = h_idx.astype(jnp.float32)[None] + flow_f[:, 1] * (H * 0.5)
    pz = d_idx.astype(jnp.float32)[None] + flow_f[:, 2] * (D * 0.5)

    x0f = jnp.floor(px); y0f = jnp.floor(py); z0f = jnp.floor(pz)
    x0i = x0f.astype(jnp.int32); y0i = y0f.astype(jnp.int32); z0i = z0f.astype(jnp.int32)
    wx1 = px - x0f; wx0 = 1.0 - wx1
    wy1 = py - y0f; wy0 = 1.0 - wy1
    wz1 = pz - z0f; wz0 = 1.0 - wz1

    def _valid(i, n_):
        return ((i >= 0) & (i < n_)).astype(jnp.float32)

    # Packed per-output-column data: corner coords (as exact-integer f32) and
    # validity-premultiplied per-axis weights.  Computed once, not per k step.
    col = jnp.stack(
        [x0f, x0f + 1.0, y0f, y0f + 1.0, z0f, z0f + 1.0,
         wx0 * _valid(x0i, W), wx1 * _valid(x0i + 1, W),
         wy0 * _valid(y0i, H), wy1 * _valid(y0i + 1, H),
         wz0 * _valid(z0i, D), wz1 * _valid(z0i + 1, D)],
        axis=1)                                              # (N, 12, S)
    col_p = jnp.pad(col, ((0, 0), (0, 0), (0, pad_o)))       # zero weights -> zero out cols

    # Band of source linear indices touched by each output tile (exact int32;
    # clipped corner lins bound every *valid* corner from below/above).
    lo = (jnp.clip(z0i, 0, D - 1) * HW + jnp.clip(y0i, 0, H - 1) * W
          + jnp.clip(x0i, 0, W - 1))
    hi = (jnp.clip(z0i + 1, 0, D - 1) * HW + jnp.clip(y0i + 1, 0, H - 1) * W
          + jnp.clip(x0i + 1, 0, W - 1))
    lo = jnp.pad(lo, ((0, 0), (0, pad_o)), constant_values=S - 1)   # ignored by min
    hi = jnp.pad(hi, ((0, 0), (0, pad_o)), constant_values=0)       # ignored by max
    lo_t = lo.reshape(N, n_out_tiles, ts_out).min(axis=-1)
    hi_t = hi.reshape(N, n_out_tiles, ts_out).max(axis=-1)
    first_blk = jnp.clip(lo_t // ts_src, 0, n_src_tiles - 1).astype(jnp.int32).reshape(-1)
    last_blk = jnp.clip(hi_t // ts_src, 0, n_src_tiles - 1).astype(jnp.int32).reshape(-1)

    # Band-restricted reduction extent (needs concrete values; if the wrapper is
    # being traced, fall back to the full source-tile range — still correct).
    try:
        max_band_tiles = int(jnp.max(last_blk - first_blk)) + 1
    except Exception:
        max_band_tiles = n_src_tiles
    max_band_tiles = max(1, min(int(max_band_tiles), n_src_tiles))

    # Per-source-row coordinates (padded rows get sentinel -1; padded src values
    # are zero, so a spurious match contributes nothing).
    lin_s = jnp.arange(S_src_p, dtype=jnp.int32)
    real = lin_s < S
    sx = jnp.where(real, lin_s % W, -1)
    sy = jnp.where(real, (lin_s // W) % H, -1)
    sz = jnp.where(real, lin_s // HW, -1)
    rowc = jnp.stack([sx, sy, sz], axis=1).astype(jnp.float32)      # (S_src_p, 3)

    src_p = jnp.pad(src.reshape(N, C, S), ((0, 0), (0, 0), (0, S_src_p - S)))

    # ----------------- pallas_call -----------------
    def _col_map(n, j, k, fb, lb):
        return (n, 0, j)

    def _rowc_map(n, j, k, fb, lb):
        t = n * n_out_tiles + j
        return (jnp.minimum(fb[t] + k, lb[t]), 0)

    def _src_map(n, j, k, fb, lb):
        t = n * n_out_tiles + j
        return (n, 0, jnp.minimum(fb[t] + k, lb[t]))

    def _out_map(n, j, k, fb, lb):
        return (n, 0, j)

    kernel = functools.partial(_st_kernel, n_out_tiles=n_out_tiles)

    itemsize = jnp.dtype(src.dtype).itemsize
    vmem_est = (5 * 4 * ts_src * ts_out                  # wmat + fx/fy/fz + temps (f32)
                + 4 * C * ts_out                         # accumulator scratch
                + 2 * (4 * 12 * ts_out                   # packed column block (x2 buf)
                       + 4 * ts_src * 128                # row-coord block (lane-padded)
                       + itemsize * C * ts_src           # src block
                       + itemsize * C * ts_out))         # out block
    try:
        vmem_cap = int(pltpu.get_tpu_info().vmem_capacity_bytes)
    except Exception:
        vmem_cap = 64 * 2**20                            # conservative (v7x physical)
    vmem_limit = int(min(vmem_cap * 3 // 4, max(32 * 2**20, 2 * vmem_est)))

    out = pl.pallas_call(
        kernel,
        out_shape=jax.ShapeDtypeStruct((N, C, S_out_p), src.dtype),
        grid_spec=pltpu.PrefetchScalarGridSpec(
            num_scalar_prefetch=2,
            grid=(N, n_out_tiles, max_band_tiles),        # band-restricted reduction last
            in_specs=[
                pl.BlockSpec((1, 12, ts_out), _col_map),
                pl.BlockSpec((ts_src, 3), _rowc_map),
                pl.BlockSpec((1, C, ts_src), _src_map),
            ],
            out_specs=pl.BlockSpec((1, C, ts_out), _out_map),
            scratch_shapes=[pltpu.VMEM((C, ts_out), jnp.float32)],
        ),
        compiler_params=pltpu.CompilerParams(
            dimension_semantics=("parallel", "parallel", "arbitrary"),
            vmem_limit_bytes=vmem_limit,
        ),
    )(first_blk, last_blk, col_p, rowc, src_p)

    return out[:, :, :S].reshape(N, C, D, H, W)


def _reference(src, flow):
    """Plain-JAX trilinear grid_sample (align_corners=False, zeros padding)."""
    N, C, D, H, W = src.shape
    S = D * H * W

    def lin_norm(n):
        return (2.0 * jnp.arange(n, dtype=jnp.float32) + 1.0) / n - 1.0

    zs, ys, xs = lin_norm(D), lin_norm(H), lin_norm(W)
    gx = jnp.broadcast_to(xs[None, None, :], (D, H, W)).reshape(S)
    gy = jnp.broadcast_to(ys[None, :, None], (D, H, W)).reshape(S)
    gz = jnp.broadcast_to(zs[:, None, None], (D, H, W)).reshape(S)

    flow_f = flow.reshape(N, 3, S)
    x = gx[None] + flow_f[:, 0]
    y = gy[None] + flow_f[:, 1]
    z = gz[None] + flow_f[:, 2]
    px = ((x + 1.0) * W - 1.0) * 0.5
    py = ((y + 1.0) * H - 1.0) * 0.5
    pz = ((z + 1.0) * D - 1.0) * 0.5
    x0 = jnp.floor(px); y0 = jnp.floor(py); z0 = jnp.floor(pz)
    x0i = x0.astype(jnp.int32); y0i = y0.astype(jnp.int32); z0i = z0.astype(jnp.int32)
    x1i = x0i + 1; y1i = y0i + 1; z1i = z0i + 1
    wx1 = px - x0; wx0 = 1.0 - wx1
    wy1 = py - y0; wy0 = 1.0 - wy1
    wz1 = pz - z0; wz0 = 1.0 - wz1

    src_flat = src.reshape(N, C, S)
    out = jnp.zeros((N, C, S), jnp.float32)
    for zi, wz in ((z0i, wz0), (z1i, wz1)):
        for yi, wy in ((y0i, wy0), (y1i, wy1)):
            for xi, wx in ((x0i, wx0), (x1i, wx1)):
                valid = ((xi >= 0) & (xi < W) & (yi >= 0) & (yi < H) &
                         (zi >= 0) & (zi < D)).astype(jnp.float32)
                w = wz * wy * wx * valid                       # (N, S)
                idx = jnp.clip(zi * (H * W) + yi * W + xi, 0, S - 1)
                g = jnp.take_along_axis(
                    src_flat, jnp.broadcast_to(idx[:, None, :], (N, C, S)), axis=2)
                out = out + w[:, None, :] * g
    return out.reshape(N, C, D, H, W)


if __name__ == "__main__":
    N, C, D, H, W = 2, 4, 8, 8, 8
    key = jax.random.PRNGKey(0)
    k1, k2 = jax.random.split(key)
    src = jax.random.normal(k1, (N, C, D, H, W), dtype=jnp.float32)
    # flow in normalized-coordinate units (moderate displacements)
    flow = 0.3 * jax.random.normal(k2, (N, 3, D, H, W), dtype=jnp.float32)

    ref = jax.block_until_ready(_reference(src, flow))

    # Small tiles exercise multi-tile accumulation + band-restricted reduction
    # (including clamped out-of-band steps) at S = 512.
    out = jax.block_until_ready(spatial_transformer(src, flow, ts_out=256, ts_src=128))
    assert out.shape == (N, C, D, H, W)
    assert jnp.allclose(out, ref, atol=2e-4, rtol=2e-4), float(jnp.max(jnp.abs(out - ref)))

    # Default (lane-dense 512) tiling path.
    out2 = jax.block_until_ready(spatial_transformer(src, flow))
    assert jnp.allclose(out2, ref, atol=2e-4, rtol=2e-4), float(jnp.max(jnp.abs(out2 - ref)))

    print("KERNEL_OK")
</pallas_src>

<mosaic_0001>
module attributes {stable_mosaic.version = 11 : i64} {
  func.func @_st_kernel(%arg0: i32, %arg1: i32, %arg2: i32, %arg3: memref<4xi32, #tpu.memory_space<smem>>, %arg4: memref<4xi32, #tpu.memory_space<smem>>, %arg5: memref<1x12x256xf32, #tpu.memory_space<vmem>>, %arg6: memref<128x3xf32, #tpu.memory_space<vmem>>, %arg7: memref<1x4x128xf32, #tpu.memory_space<vmem>>, %arg8: memref<1x4x256xf32, #tpu.memory_space<vmem>>, %arg9: memref<4x256xf32, #tpu.memory_space<vmem>>) attributes {dimension_semantics = [#tpu.dimension_semantics<parallel>, #tpu.dimension_semantics<parallel>, #tpu.dimension_semantics<arbitrary>], iteration_bounds = array<i64: 2, 2, 4>, scalar_prefetch = 2 : i64, scratch_operands = 1 : i64, tpu.core_type = #tpu.core_type<tc>, window_params = [{transform_indices = @transform_0, window_bounds = array<i64: 1, 12, 256>}, {transform_indices = @transform_1, window_bounds = array<i64: 128, 3>}, {transform_indices = @transform_2, window_bounds = array<i64: 1, 4, 128>}, {transform_indices = @transform_3, window_bounds = array<i64: 1, 4, 256>}]} {
    %c0_i32 = arith.constant 0 : i32
    %0 = arith.cmpi eq, %arg2, %c0_i32 : i32
    %1 = arith.extui %0 : i1 to i32
    %c0_i32_0 = arith.constant 0 : i32
    %2 = arith.cmpi ne, %1, %c0_i32_0 : i32
    scf.if %2 {
      %cst = arith.constant 0.000000e+00 : f32
      %16 = vector.broadcast %cst : f32 to vector<4x256xf32>
      %c0 = arith.constant 0 : index
      %c0_3 = arith.constant 0 : index
      %17 = vector.load %arg9[%c0, %c0_3] : memref<4x256xf32, #tpu.memory_space<vmem>>, vector<4x256xf32>
      tpu.vector_store %arg9[%c0, %c0_3], %16 {strides = array<i32>} : memref<4x256xf32, #tpu.memory_space<vmem>>, vector<4x256xf32>,
    } else {
    }
    %c2_i32 = arith.constant 2 : i32
    %3 = arith.muli %arg0, %c2_i32 : i32
    %4 = arith.addi %3, %arg1 : i32
    %5 = arith.index_cast %4 : i32 to index
    %6 = memref.load %arg4[%5] : memref<4xi32, #tpu.memory_space<smem>>
    %7 = arith.index_cast %4 : i32 to index
    %8 = memref.load %arg3[%7] : memref<4xi32, #tpu.memory_space<smem>>
    %9 = arith.subi %6, %8 : i32
    %10 = arith.cmpi sle, %arg2, %9 : i32
    %11 = arith.extui %10 : i1 to i32
    %c0_i32_1 = arith.constant 0 : i32
    %12 = arith.cmpi ne, %11, %c0_i32_1 : i32
    scf.if %12 {
      %c0 = arith.constant 0 : index
      %c0_3 = arith.constant 0 : index
      %c0_4 = arith.constant 0 : index
      %16 = vector.load %arg5[%c0, %c0_3, %c0_4] : memref<1x12x256xf32, #tpu.memory_space<vmem>>, vector<1x12x256xf32>
      %17 = vector.shape_cast %16 : vector<1x12x256xf32> to vector<12x256xf32>
      %18 = vector.extract_strided_slice %17 {offsets = [0, 0], sizes = [1, 256], strides = [1, 1]} : vector<12x256xf32> to vector<1x256xf32>
      %19 = vector.extract_strided_slice %17 {offsets = [1, 0], sizes = [1, 256], strides = [1, 1]} : vector<12x256xf32> to vector<1x256xf32>
      %20 = vector.extract_strided_slice %17 {offsets = [2, 0], sizes = [1, 256], strides = [1, 1]} : vector<12x256xf32> to vector<1x256xf32>
      %21 = vector.extract_strided_slice %17 {offsets = [3, 0], sizes = [1, 256], strides = [1, 1]} : vector<12x256xf32> to vector<1x256xf32>
      %22 = vector.extract_strided_slice %17 {offsets = [4, 0], sizes = [1, 256], strides = [1, 1]} : vector<12x256xf32> to vector<1x256xf32>
      %23 = vector.extract_strided_slice %17 {offsets = [5, 0], sizes = [1, 256], strides = [1, 1]} : vector<12x256xf32> to vector<1x256xf32>
      %24 = vector.extract_strided_slice %17 {offsets = [6, 0], sizes = [1, 256], strides = [1, 1]} : vector<12x256xf32> to vector<1x256xf32>
      %25 = vector.extract_strided_slice %17 {offsets = [7, 0], sizes = [1, 256], strides = [1, 1]} : vector<12x256xf32> to vector<1x256xf32>
      %26 = vector.extract_strided_slice %17 {offsets = [8, 0], sizes = [1, 256], strides = [1, 1]} : vector<12x256xf32> to vector<1x256xf32>
      %27 = vector.extract_strided_slice %17 {offsets = [9, 0], sizes = [1, 256], strides = [1, 1]} : vector<12x256xf32> to vector<1x256xf32>
      %28 = vector.extract_strided_slice %17 {offsets = [10, 0], sizes = [1, 256], strides = [1, 1]} : vector<12x256xf32> to vector<1x256xf32>
      %29 = vector.extract_strided_slice %17 {offsets = [11, 0], sizes = [1, 256], strides = [1, 1]} : vector<12x256xf32> to vector<1x256xf32>
      %c0_5 = arith.constant 0 : index
      %c0_6 = arith.constant 0 : index
      %30 = vector.load %arg6[%c0_5, %c0_6] : memref<128x3xf32, #tpu.memory_space<vmem>>, vector<128x3xf32>
      %31 = vector.extract_strided_slice %30 {offsets = [0, 0], sizes = [128, 1], strides = [1, 1]} : vector<128x3xf32> to vector<128x1xf32>
      %32 = vector.extract_strided_slice %30 {offsets = [0, 1], sizes = [128, 1], strides = [1, 1]} : vector<128x3xf32> to vector<128x1xf32>
      %33 = vector.extract_strided_slice %30 {offsets = [0, 2], sizes = [128, 1], strides = [1, 1]} : vector<128x3xf32> to vector<128x1xf32>
      %34 = vector.broadcast %31 : vector<128x1xf32> to vector<128x256xf32>
      %35 = vector.broadcast %18 : vector<1x256xf32> to vector<128x256xf32>
      %36 = arith.cmpf oeq, %34, %35 : vector<128x256xf32>
      %37 = vector.broadcast %31 : vector<128x1xf32> to vector<128x256xf32>
      %38 = vector.broadcast %19 : vector<1x256xf32> to vector<128x256xf32>
      %39 = arith.cmpf oeq, %37, %38 : vector<128x256xf32>
      %cst = arith.constant 0.000000e+00 : f32
      %40 = vector.shape_cast %25 : vector<1x256xf32> to vector<1x256xf32>
      %41 = vector.broadcast %40 : vector<1x256xf32> to vector<128x256xf32>
      %42 = vector.broadcast %cst : f32 to vector<128x256xf32>
      %43 = arith.select %39, %41, %42 : vector<128x256xi1>, vector<128x256xf32>
      %44 = vector.shape_cast %24 : vector<1x256xf32> to vector<1x256xf32>
      %45 = vector.broadcast %44 : vector<1x256xf32> to vector<128x256xf32>
      %46 = arith.select %36, %45, %43 : vector<128x256xi1>, vector<128x256xf32>
      %47 = vector.broadcast %32 : vector<128x1xf32> to vector<128x256xf32>
      %48 = vector.broadcast %20 : vector<1x256xf32> to vector<128x256xf32>
      %49 = arith.cmpf oeq, %47, %48 : vector<128x256xf32>
      %50 = vector.broadcast %32 : vector<128x1xf32> to vector<128x256xf32>
      %51 = vector.broadcast %21 : vector<1x256xf32> to vector<128x256xf32>
      %52 = arith.cmpf oeq, %50, %51 : vector<128x256xf32>
      %cst_7 = arith.constant 0.000000e+00 : f32
      %53 = vector.shape_cast %27 : vector<1x256xf32> to vector<1x256xf32>
      %54 = vector.broadcast %53 : vector<1x256xf32> to vector<128x256xf32>
      %55 = vector.broadcast %cst_7 : f32 to vector<128x256xf32>
      %56 = arith.select %52, %54, %55 : vector<128x256xi1>, vector<128x256xf32>
      %57 = vector.shape_cast %26 : vector<1x256xf32> to vector<1x256xf32>
      %58 = vector.broadcast %57 : vector<1x256xf32> to vector<128x256xf32>
      %59 = arith.select %49, %58, %56 : vector<128x256xi1>, vector<128x256xf32>
      %60 = vector.broadcast %33 : vector<128x1xf32> to vector<128x256xf32>
      %61 = vector.broadcast %22 : vector<1x256xf32> to vector<128x256xf32>
      %62 = arith.cmpf oeq, %60, %61 : vector<128x256xf32>
      %63 = vector.broadcast %33 : vector<128x1xf32> to vector<128x256xf32>
      %64 = vector.broadcast %23 : vector<1x256xf32> to vector<128x256xf32>
      %65 = arith.cmpf oeq, %63, %64 : vector<128x256xf32>
      %cst_8 = arith.constant 0.000000e+00 : f32
      %66 = vector.shape_cast %29 : vector<1x256xf32> to vector<1x256xf32>
      %67 = vector.broadcast %66 : vector<1x256xf32> to vector<128x256xf32>
      %68 = vector.broadcast %cst_8 : f32 to vector<128x256xf32>
      %69 = arith.select %65, %67, %68 : vector<128x256xi1>, vector<128x256xf32>
      %70 = vector.shape_cast %28 : vector<1x256xf32> to vector<1x256xf32>
      %71 = vector.broadcast %70 : vector<1x256xf32> to vector<128x256xf32>
      %72 = arith.select %62, %71, %69 : vector<128x256xi1>, vector<128x256xf32>
      %73 = arith.mulf %72, %59 : vector<128x256xf32>
      %74 = arith.mulf %73, %46 : vector<128x256xf32>
      %c0_9 = arith.constant 0 : index
      %c0_10 = arith.constant 0 : index
      %c0_11 = arith.constant 0 : index
      %75 = vector.load %arg7[%c0_9, %c0_10, %c0_11] : memref<1x4x128xf32, #tpu.memory_space<vmem>>, vector<1x4x128xf32>
      %76 = vector.shape_cast %75 : vector<1x4x128xf32> to vector<4x128xf32>
      %c0_12 = arith.constant 0 : index
      %c0_13 = arith.constant 0 : index
      %77 = vector.load %arg9[%c0_12, %c0_13] : memref<4x256xf32, #tpu.memory_space<vmem>>, vector<4x256xf32>
      %cst_14 = arith.constant dense<0.000000e+00> : vector<4x256xf32>
      %78 = tpu.matmul %76, %74, %cst_14 {dimension_numbers = #tpu.dot_dimension_numbers<[1], [0], [0], [1], [0, 0, 1, 1], [], []>} : vector<4x128xf32>, vector<128x256xf32>, vector<4x256xf32> -> vector<4x256xf32>
      %79 = arith.addf %77, %78 : vector<4x256xf32>
      %c0_15 = arith.constant 0 : index
      %c0_16 = arith.constant 0 : index
      %80 = vector.load %arg9[%c0_15, %c0_16] : memref<4x256xf32, #tpu.memory_space<vmem>>, vector<4x256xf32>
      tpu.vector_store %arg9[%c0_15, %c0_16], %79 {strides = array<i32>} : memref<4x256xf32, #tpu.memory_space<vmem>>, vector<4x256xf32>,
    } else {
    }
    %c3_i32 = arith.constant 3 : i32
    %13 = arith.cmpi eq, %arg2, %c3_i32 : i32
    %14 = arith.extui %13 : i1 to i32
    %c0_i32_2 = arith.constant 0 : i32
    %15 = arith.cmpi ne, %14, %c0_i32_2 : i32
    scf.if %15 {
      %c0 = arith.constant 0 : index
      %c0_3 = arith.constant 0 : index
      %16 = vector.load %arg9[%c0, %c0_3] : memref<4x256xf32, #tpu.memory_space<vmem>>, vector<4x256xf32>
      %c0_4 = arith.constant 0 : index
      %c0_5 = arith.constant 0 : index
      %c0_6 = arith.constant 0 : index
      %17 = vector.load %arg8[%c0_4, %c0_5, %c0_6] : memref<1x4x256xf32, #tpu.memory_space<vmem>>, vector<1x4x256xf32>
      %18 = vector.shape_cast %17 : vector<1x4x256xf32> to vector<4x256xf32>
      %19 = vector.shape_cast %16 : vector<4x256xf32> to vector<1x4x256xf32>
      tpu.vector_store %arg8[%c0_4, %c0_5, %c0_6], %19 {strides = array<i32>} : memref<1x4x256xf32, #tpu.memory_space<vmem>>, vector<1x4x256xf32>,
    } else {
    }
    return
  }
  func.func @transform_0(%arg0: i32, %arg1: i32, %arg2: i32, %arg3: memref<4xi32, #tpu.memory_space<smem>>, %arg4: memref<4xi32, #tpu.memory_space<smem>>) -> (i32, i32, i32) {
    %c0_i32 = arith.constant 0 : i32
    %c0_i32_0 = arith.constant 0 : i32
    return %arg0, %c0_i32, %arg1 : i32, i32, i32
  }
  func.func @transform_1(%arg0: i32, %arg1: i32, %arg2: i32, %arg3: memref<4xi32, #tpu.memory_space<smem>>, %arg4: memref<4xi32, #tpu.memory_space<smem>>) -> (i32, i32) {
    %c2_i32 = arith.constant 2 : i32
    %0 = arith.muli %arg0, %c2_i32 : i32
    %1 = arith.addi %0, %arg1 : i32
    %2 = arith.index_cast %1 : i32 to index
    %3 = memref.load %arg3[%2] : memref<4xi32, #tpu.memory_space<smem>>
    %4 = arith.addi %3, %arg2 : i32
    %5 = arith.index_cast %1 : i32 to index
    %6 = memref.load %arg4[%5] : memref<4xi32, #tpu.memory_space<smem>>
    %7 = arith.minsi %4, %6 : i32
    %c0_i32 = arith.constant 0 : i32
    %c0_i32_0 = arith.constant 0 : i32
    return %7, %c0_i32 : i32, i32
  }
  func.func @transform_2(%arg0: i32, %arg1: i32, %arg2: i32, %arg3: memref<4xi32, #tpu.memory_space<smem>>, %arg4: memref<4xi32, #tpu.memory_space<smem>>) -> (i32, i32, i32) {
    %c2_i32 = arith.constant 2 : i32
    %0 = arith.muli %arg0, %c2_i32 : i32
    %1 = arith.addi %0, %arg1 : i32
    %2 = arith.index_cast %1 : i32 to index
    %3 = memref.load %arg3[%2] : memref<4xi32, #tpu.memory_space<smem>>
    %4 = arith.addi %3, %arg2 : i32
    %5 = arith.index_cast %1 : i32 to index
    %6 = memref.load %arg4[%5] : memref<4xi32, #tpu.memory_space<smem>>
    %7 = arith.minsi %4, %6 : i32
    %c0_i32 = arith.constant 0 : i32
    %c0_i32_0 = arith.constant 0 : i32
    return %arg0, %c0_i32, %7 : i32, i32, i32
  }
  func.func @transform_3(%arg0: i32, %arg1: i32, %arg2: i32, %arg3: memref<4xi32, #tpu.memory_space<smem>>, %arg4: memref<4xi32, #tpu.memory_space<smem>>) -> (i32, i32, i32) {
    %c0_i32 = arith.constant 0 : i32
    %c0_i32_0 = arith.constant 0 : i32
    return %arg0, %c0_i32, %arg1 : i32, i32, i32
  }
}

</mosaic_0001>

<llo_original>
// kernel: tpu_custom_call.1
$region0: #{tpu_custom_call.1}
  #allocation0 [shape = 'u32[]', space=smem, size = 0x4, offset = 0x4, fixed_abs, tag = 'smem constant byte address 0x4 - core index']
  #allocation1 [shape = 'u32[144,128]{1,0:T(1,128)}', space=vmem, size = 0x12000, scoped, tag = 'internal scratch']
  #allocation2 [shape = 'f32[4,256]{1,0:T(4,128)}', space=vmem, size = 0x1000, scoped, tag = 'scratch operand']
  #allocation3 [shape = 's32[1]{0}', space=sflag, size = 0x4, scoped, tag = 'scoped memory for tpu_custom_call.1']
  #allocation4 [shape = 'u8[512]{0}', space=smem, size = 0x200, scoped, tag = 'prefetched SMEM operand 0']
  #allocation5 [shape = 'u8[512]{0}', space=smem, size = 0x200, scoped, tag = 'prefetched SMEM operand 1']
  %s0 = inlined_call_operand.vmem [shape: s32[4], index: 0, kind: input, shape index: {}]
  %s1 = inlined_call_operand.vmem [shape: s32[4], index: 1, kind: input, shape index: {}]
  %s2 = inlined_call_operand.vmem [shape: f32[2,12,512], index: 2, kind: input, shape index: {}]
  %s3 = inlined_call_operand.vmem [shape: f32[512,3], index: 3, kind: input, shape index: {}]
  %s4 = inlined_call_operand.vmem [shape: f32[2,4,512], index: 4, kind: input, shape index: {}]
  %s5 = inlined_call_operand.hbm [shape: f32[2,4,512], index: 5, kind: output, shape index: {}]
  %s6 = sld [smem:[#allocation0]]
  $region80: #{tpu_custom_call.1} parent=0
    _
  %s8 = ssub.s32 1, %s6
  %s9 = scalar_select 0, %s8, %s6
  %s10 = sshll.u32 %s0, 4
  %s11 = int_to_ptr.vmem [resolvable:$true] %s10
  %13 = dma.vmem_to_smem %s11, 16, [#allocation4], [#allocation3]
  %s14 = sshll.u32 %s1, 4
  %s15 = int_to_ptr.vmem [resolvable:$true] %s14
  %17 = dma.vmem_to_smem %s15, 16, [#allocation5], [#allocation3]
  %18 = dma.done [#allocation3], 32
  %19 = sfence
  $region1: #{tpu_custom_call.1} parent=0
    #allocation6 [shape = 'u8[32768]{0}', space=vmem, size = 0x8000, scoped, tag = 'input window, operand 2']
    #allocation7 [shape = 'u8[8192]{0}', space=vmem, size = 0x2000, scoped, tag = 'output window, operand 0']
    #allocation8 [shape = 's32[2]{0}', space=sflag, size = 0x8, scoped, tag = 'scoped memory for tpu_custom_call.1']
    %20 = vsyncpa [#allocation8], 0
    %s21 = scalar_lea.sflag [#allocation8], 1
    %22 = vsyncpa %s21, 0
    loop: start=0, step=1, limit=18
    $region2: #{tpu_custom_call.1} parent=1 // loop_pre_header
      _
    $region3: #{tpu_custom_call.1} parent=1 // loop_header
      %s24 = sphi 0, %s28
      %p25 = scmp.ge.s32.totalorder %s24, 18
      %s31 = sphi 0, %s50
      %s32 = sphi 0, %s46
      %s33 = sphi 0, %s42
      %s34 = sphi 0, %s31
      %s35 = sphi 0, %s32
      %s36 = sphi 0, %s33
      %s37 = sphi 0, %s34
      %s38 = sphi 0, %s35
      %s39 = sphi 0, %s36
      %s55 = sphi 0, %s57
      %s58 = sphi 0, %s55
      %s59 = sphi 0, %s58
      %s75 = sphi 0, %s59
      %s95 = sphi 0, %s97
      %s98 = sphi 0, %s95
      %s99 = sphi 0, %s98
      %s115 = sphi 0, %s99
      %s137 = sphi 0, %s139
      %s140 = sphi 0, %s137
      %s141 = sphi 0, %s140
      %s157 = sphi 0, %s141
      %s165 = sphi 0, %s167
      %s168 = sphi 0, %s165
      %s169 = sphi 0, %s168
      %s185 = sphi 0, %s169
    $region4: #{tpu_custom_call.1} parent=1 // loop_header_branch
      %27 = sbr.rel (%p25) target = $region8
    $region5: #{tpu_custom_call.1} parent=1 // loop_body
      %s29 = ssub.s32 %s24, 1
      %s30 = ssub.s32 %s24, 2
      %s40 = sadd.s32 1, %s33
      %p41 = scmp.ge.s32.totalorder %s40, 4
      %s42 = scalar_select %p41, 0, %s40
      %s43 = sadd.s32 1, %s32
      %s44 = scalar_select %p41, %s43, %s32
      %p45 = scmp.ge.s32.totalorder %s44, 2
      %s46 = scalar_select %p45, 0, %s44
      %s47 = sadd.s32 1, %s31
      %s48 = scalar_select %p45, %s47, %s31
      %p49 = scmp.ge.s32.totalorder %s48, 2
      %s50 = scalar_select %p49, 0, %s48
      %s51 = ssub.s32 %s31, %s50
      %s52 = ssub.s32 %s32, %s46
      %s53 = sor.u32 %s51, %s52
      %p54 = scmp.eq.s32.totalorder %s53, 0
      %s56 = sadd.s32 %s55, 1
      %s57 = scalar_select %p54, %s55, %s56
      %p60 = pneg %p54
      %p61 = scmp.eq.s32.totalorder %s24, 15
      %p62 = por %p60, %p61
      %p63 = scmp.ne.s32.totalorder %s55, %s58
      %p64 = scmp.eq.s32.totalorder %s24, 0
      %p65 = por %p63, %p64
      %p66 = scmp.ne.s32.totalorder %s55, %s58
      %p67 = scmp.eq.s32.totalorder %s29, 15
      %p68 = por %p66, %p67
      %p69 = scmp.ne.s32.totalorder %s58, %s59
      %p70 = scmp.eq.s32.totalorder %s29, 0
      %p71 = por %p69, %p70
      %p72 = scmp.ne.s32.totalorder %s58, %s59
      %p73 = scmp.eq.s32.totalorder %s30, 15
      %p74 = por %p72, %p73
      %p76 = scmp.ne.s32.totalorder %s59, %s75
      %p77 = scmp.eq.s32.totalorder %s30, 0
      %p78 = por %p76, %p77
      %s79 = smul.u32 %s31, 2
      %s80 = sadd.s32 %s79, %s32
      %s81 = sld [smem:[#allocation4 + %s80]]
      %s82 = sadd.s32 %s81, %s33
      %s83 = sld [smem:[#allocation5 + %s80]]
      %p84 = scmp.lt.s32.totalorder %s82, %s83
      %s85 = scalar_select %p84, %s82, %s83
      %s86 = smul.u32 %s50, 2
      %s87 = sadd.s32 %s86, %s46
      %s88 = sld [smem:[#allocation4 + %s87]]
      %s89 = sadd.s32 %s88, %s42
      %s90 = sld [smem:[#allocation5 + %s87]]
      %p91 = scmp.lt.s32.totalorder %s89, %s90
      %s92 = scalar_select %p91, %s89, %s90
      %s93 = ssub.s32 %s85, %s92
      %p94 = scmp.eq.s32.totalorder %s93, 0
      %s96 = sadd.s32 %s95, 1
      %s97 = scalar_select %p94, %s95, %s96
      %p100 = pneg %p94
      %p101 = scmp.eq.s32.totalorder %s24, 15
      %p102 = por %p100, %p101
      %p103 = scmp.ne.s32.totalorder %s95, %s98
      %p104 = scmp.eq.s32.totalorder %s24, 0
      %p105 = por %p103, %p104
      %p106 = scmp.ne.s32.totalorder %s95, %s98
      %p107 = scmp.eq.s32.totalorder %s29, 15
      %p108 = por %p106, %p107
      %p109 = scmp.ne.s32.totalorder %s98, %s99
      %p110 = scmp.eq.s32.totalorder %s29, 0
      %p111 = por %p109, %p110
      %p112 = scmp.ne.s32.totalorder %s98, %s99
      %p113 = scmp.eq.s32.totalorder %s30, 15
      %p114 = por %p112, %p113
      %p116 = scmp.ne.s32.totalorder %s99, %s115
      %p117 = scmp.eq.s32.totalorder %s30, 0
      %p118 = por %p116, %p117
      %s119 = smul.u32 %s31, 2
      %s120 = sadd.s32 %s119, %s32
      %s121 = sld [smem:[#allocation4 + %s120]]
      %s122 = sadd.s32 %s121, %s33
      %s123 = sld [smem:[#allocation5 + %s120]]
      %p124 = scmp.lt.s32.totalorder %s122, %s123
      %s125 = scalar_select %p124, %s122, %s123
      %s126 = smul.u32 %s50, 2
      %s127 = sadd.s32 %s126, %s46
      %s128 = sld [smem:[#allocation4 + %s127]]
      %s129 = sadd.s32 %s128, %s42
      %s130 = sld [smem:[#allocation5 + %s127]]
      %p131 = scmp.lt.s32.totalorder %s129, %s130
      %s132 = scalar_select %p131, %s129, %s130
      %s133 = ssub.s32 %s31, %s50
      %s134 = ssub.s32 %s125, %s132
      %s135 = sor.u32 %s133, %s134
      %p136 = scmp.eq.s32.totalorder %s135, 0
      %s138 = sadd.s32 %s137, 1
      %s139 = scalar_select %p136, %s137, %s138
      %p142 = pneg %p136
      %p143 = scmp.eq.s32.totalorder %s24, 15
      %p144 = por %p142, %p143
      %p145 = scmp.ne.s32.totalorder %s137, %s140
      %p146 = scmp.eq.s32.totalorder %s24, 0
      %p147 = por %p145, %p146
      %p148 = scmp.ne.s32.totalorder %s137, %s140
      %p149 = scmp.eq.s32.totalorder %s29, 15
      %p150 = por %p148, %p149
      %p151 = scmp.ne.s32.totalorder %s140, %s141
      %p152 = scmp.eq.s32.totalorder %s29, 0
      %p153 = por %p151, %p152
      %p154 = scmp.ne.s32.totalorder %s140, %s141
      %p155 = scmp.eq.s32.totalorder %s30, 15
      %p156 = por %p154, %p155
      %p158 = scmp.ne.s32.totalorder %s141, %s157
      %p159 = scmp.eq.s32.totalorder %s30, 0
      %p160 = por %p158, %p159
      %s161 = ssub.s32 %s31, %s50
      %s162 = ssub.s32 %s32, %s46
      %s163 = sor.u32 %s161, %s162
      %p164 = scmp.eq.s32.totalorder %s163, 0
      %s166 = sadd.s32 %s165, 1
      %s167 = scalar_select %p164, %s165, %s166
      %p170 = pneg %p164
      %p171 = scmp.eq.s32.totalorder %s24, 15
      %p172 = por %p170, %p171
      %p173 = scmp.ne.s32.totalorder %s165, %s168
      %p174 = scmp.eq.s32.totalorder %s24, 0
      %p175 = por %p173, %p174
      %p176 = scmp.ne.s32.totalorder %s165, %s168
      %p177 = scmp.eq.s32.totalorder %s29, 15
      %p178 = por %p176, %p177
      %p179 = scmp.ne.s32.totalorder %s168, %s169
      %p180 = scmp.eq.s32.totalorder %s29, 0
      %p181 = por %p179, %p180
      %p182 = scmp.ne.s32.totalorder %s168, %s169
      %p183 = scmp.eq.s32.totalorder %s30, 15
      %p184 = por %p182, %p183
      %p186 = scmp.ne.s32.totalorder %s169, %s185
      %p187 = scmp.eq.s32.totalorder %s30, 0
      %p188 = por %p186, %p187
      %p189 = scmp.le.s32.totalorder 1, %s24
      %p190 = scmp.lt.s32.totalorder %s24, 17
      %p191 = pnand %p189, %p190
      %p192 = pneg %p191
      // Predicated region
      $region9: #{tpu_custom_call.1} parent=5 // pred_check
        _
      $region10: #{tpu_custom_call.1} parent=5 // pred_check_branch
        %194 = sbr.rel (%p191) target = $region12
      $region11: #{tpu_custom_call.1} parent=5 // pred_region
        %s195 = ssub.s32 %s24, 1
      $region12: #{tpu_custom_call.1} parent=5 // pred_fallthru
        _
      %p196 = scmp.lt.s32.totalorder %s24, 16
      // Predicated region
      $region13: #{tpu_custom_call.1} parent=5 // pred_check
        %p197 = pneg %p196
      $region14: #{tpu_custom_call.1} parent=5 // pred_check_branch
        %199 = sbr.rel (%p197) target = $region16
      $region15: #{tpu_custom_call.1} parent=5 // pred_region
        // Predicated region
        $region17: #{tpu_custom_call.1} parent=15 // pred_check
          %p200 = pneg %p65
        $region18: #{tpu_custom_call.1} parent=15 // pred_check_branch
          %202 = sbr.rel (%p200) target = $region20
        $region19: #{tpu_custom_call.1} parent=15 // pred_region
          %s203 = sand.u32 %s55, 1
          %s204 = sand.u32 %s55, 1
          %s205 = smul.addr %s204, 32
          %s206 = scalar_lea.vmem [#allocation6], %s205
          %s207 = smul.u32 2, %s32
          %s208 = smul.addr %s31, 8
          %s209 = sadd.s32 %s207, %s208
          %s210 = smul.addr %s209, 8
          %s211 = scalar_lea.vmem %s2, %s210
          // Predicated region
          $region21: #{tpu_custom_call.1} parent=19 // pred_check
            _
          $region22: #{tpu_custom_call.1} parent=19 // pred_check_branch
            %213 = sbr.rel (0) target = $region24
          $region23: #{tpu_custom_call.1} parent=19 // pred_region
            // Predicated region
            $region25: #{tpu_custom_call.1} parent=23 // pred_check
              _
            $region26: #{tpu_custom_call.1} parent=23 // pred_check_branch
              %215 = sbr.rel (0) target = $region28
            $region27: #{tpu_custom_call.1} parent=23 // pred_region
              loop: start=0, step=1, limit=1
              $region29: #{tpu_custom_call.1} parent=27 // loop_pre_header
                _
              $region30: #{tpu_custom_call.1} parent=27 // loop_header
                %s217 = sphi 0, %s221
                %p218 = scmp.ge.s32.totalorder %s217, 1
                %s222 = sphi %s211, %s211
                %s223 = sphi %s206, %s206
              $region31: #{tpu_custom_call.1} parent=27 // loop_header_branch
                %220 = sbr.rel (%p218) target = $region35
              $region32: #{tpu_custom_call.1} parent=27 // loop_body
                %v224 = vld [vmem:[%s222] sm:$0xff]
                %225 = vst [vmem:[%s223] sm:$0xff] %v224
                %v226 = vld [vmem:[%s222 + $0x8] sm:$0xff]
                %227 = vst [vmem:[%s223 + $0x8] sm:$0xff] %v226
                %v228 = vld [vmem:[%s222 + $0x20] sm:$0xff]
                %229 = vst [vmem:[%s223 + $0x10] sm:$0xff] %v228
                %v230 = vld [vmem:[%s222 + $0x28] sm:$0xff]
                %231 = vst [vmem:[%s223 + $0x18] sm:$0xff] %v230
              $region33: #{tpu_custom_call.1} parent=27 // loop_footer
                %s221 = sadd.s32 1, %s217
              $region34: #{tpu_custom_call.1} parent=27 // loop_footer_branch
                %216 = sbr.rel target = $region30
              $region35: #{tpu_custom_call.1} parent=27 // loop_exit
                _
            $region28: #{tpu_custom_call.1} parent=23 // pred_fallthru
              _
            // Predicated region
            $region36: #{tpu_custom_call.1} parent=23 // pred_check
              _
            $region37: #{tpu_custom_call.1} parent=23 // pred_check_branch
              %233 = sbr.rel target = $region39
            $region38: #{tpu_custom_call.1} parent=23 // pred_region
              _
            $region39: #{tpu_custom_call.1} parent=23 // pred_fallthru
              _
          $region24: #{tpu_custom_call.1} parent=19 // pred_fallthru
            _
          %234 = vnop
        $region20: #{tpu_custom_call.1} parent=15 // pred_fallthru
          _
        // Predicated region
        $region40: #{tpu_custom_call.1} parent=15 // pred_check
          %p235 = pneg %p105
        $region41: #{tpu_custom_call.1} parent=15 // pred_check_branch
          %237 = sbr.rel (%p235) target = $region43
        $region42: #{tpu_custom_call.1} parent=15 // pred_region
          %s238 = smul.u32 %s31, 2
          %s239 = sadd.s32 %s238, %s32
          %s240 = sld [smem:[#allocation4 + %s239]]
          %s241 = sadd.s32 %s240, %s33
          %s242 = sld [smem:[#allocation5 + %s239]]
          %p243 = scmp.lt.s32.totalorder %s241, %s242
          %s244 = scalar_select %p243, %s241, %s242
          %s245 = smul.u32 16, %s244
          %p246 = scmp.lt.s32.totalorder %s245, 63
          %s247 = scalar_select %p246, %s245, 63
          %s248 = smul.addr %s247, 8
          %s249 = scalar_lea.vmem %s3, %s248
          %s250 = smul.u32 %s31, 2
          %s251 = sadd.s32 %s250, %s32
          %s252 = sld [smem:[#allocation4 + %s251]]
          %s253 = sadd.s32 %s252, %s33
          %s254 = sld [smem:[#allocation5 + %s251]]
          %p255 = scmp.lt.s32.totalorder %s253, %s254
          %s256 = scalar_select %p255, %s253, %s254
          %s257 = smul.u32 16, %s256
        $region43: #{tpu_custom_call.1} parent=15 // pred_fallthru
          _
        // Predicated region
        $region44: #{tpu_custom_call.1} parent=15 // pred_check
          %p258 = pneg %p147
        $region45: #{tpu_custom_call.1} parent=15 // pred_check_branch
          %260 = sbr.rel (%p258) target = $region47
        $region46: #{tpu_custom_call.1} parent=15 // pred_region
          %s261 = smul.u32 %s31, 2
          %s262 = sadd.s32 %s261, %s32
          %s263 = sld [smem:[#allocation4 + %s262]]
          %s264 = sadd.s32 %s263, %s33
          %s265 = sld [smem:[#allocation5 + %s262]]
          %p266 = scmp.lt.s32.totalorder %s264, %s265
          %s267 = scalar_select %p266, %s264, %s265
          %p268 = scmp.lt.s32.totalorder %s31, 1
          %s269 = scalar_select %p268, %s31, 1
          %p270 = scmp.lt.s32.totalorder %s267, 3
          %s271 = scalar_select %p270, %s267, 3
          %s272 = smul.addr %s269, 4
          %s273 = sadd.s32 %s271, %s272
          %s274 = smul.addr %s273, 4
          %s275 = scalar_lea.vmem %s4, %s274
          %s276 = smul.u32 %s31, 2
          %s277 = sadd.s32 %s276, %s32
          %s278 = sld [smem:[#allocation4 + %s277]]
          %s279 = sadd.s32 %s278, %s33
          %s280 = sld [smem:[#allocation5 + %s277]]
          %p281 = scmp.lt.s32.totalorder %s279, %s280
          %s282 = scalar_select %p281, %s279, %s280
        $region47: #{tpu_custom_call.1} parent=15 // pred_fallthru
          _
      $region16: #{tpu_custom_call.1} parent=5 // pred_fallthru
        _
      %p283 = scmp.le.s32.totalorder 1, %s24
      %p284 = scmp.lt.s32.totalorder %s24, 17
      %p285 = pnand %p283, %p284
      %p286 = pneg %p285
      // Predicated region
      $region48: #{tpu_custom_call.1} parent=5 // pred_check
        _
      $region49: #{tpu_custom_call.1} parent=5 // pred_check_branch
        %288 = sbr.rel (%p285) target = $region51
      $region50: #{tpu_custom_call.1} parent=5 // pred_region
        %s289 = ssub.s32 %s24, 1
        %s290 = sand.u32 %s58, 1
        %s291 = sand.u32 %s58, 1
        %s292 = smul.addr %s291, 32
        %s293 = scalar_lea.vmem [#allocation6], %s292
        // Predicated region
        $region52: #{tpu_custom_call.1} parent=50 // pred_check
          %p294 = pneg %p71
        $region53: #{tpu_custom_call.1} parent=50 // pred_check_branch
          %296 = sbr.rel (%p294) target = $region55
        $region54: #{tpu_custom_call.1} parent=50 // pred_region
          _
        $region55: #{tpu_custom_call.1} parent=50 // pred_fallthru
          _
        %s297 = sand.u32 %s58, 1
        %s298 = sand.u32 %s58, 1
        %s299 = smul.addr %s298, 32
        %s300 = scalar_lea.vmem [#allocation6], %s299
        %p301 = pneg %p71
        %p302 = pneg %p68
        %s303 = smul.u32 %s34, 2
        %s304 = sadd.s32 %s303, %s35
        %s305 = sld [smem:[#allocation4 + %s304]]
        %s306 = sadd.s32 %s305, %s36
        %s307 = sld [smem:[#allocation5 + %s304]]
        %p308 = scmp.lt.s32.totalorder %s306, %s307
        %s309 = scalar_select %p308, %s306, %s307
        %s310 = smul.u32 16, %s309
        %p311 = scmp.lt.s32.totalorder %s310, 63
        %s312 = scalar_select %p311, %s310, 63
        %s313 = smul.addr %s312, 8
        %s314 = scalar_lea.vmem %s3, %s313
        %p315 = pneg %p111
        %p316 = pneg %p108
        %s317 = smul.u32 %s34, 2
        %s318 = sadd.s32 %s317, %s35
        %s319 = sld [smem:[#allocation4 + %s318]]
        %s320 = sadd.s32 %s319, %s36
        %s321 = sld [smem:[#allocation5 + %s318]]
        %p322 = scmp.lt.s32.totalorder %s320, %s321
        %s323 = scalar_select %p322, %s320, %s321
        %p324 = scmp.lt.s32.totalorder %s34, 1
        %s325 = scalar_select %p324, %s34, 1
        %p326 = scmp.lt.s32.totalorder %s323, 3
        %s327 = scalar_select %p326, %s323, 3
        %s328 = smul.addr %s325, 4
        %s329 = sadd.s32 %s327, %s328
        %s330 = smul.addr %s329, 4
        %s331 = scalar_lea.vmem %s4, %s330
        %p332 = pneg %p153
        %p333 = pneg %p150
        %p334 = pneg %p181
        %p335 = pneg %p178
        %s336 = sand.u32 %s168, 1
        %s337 = scalar_lea.sflag [#allocation8], %s336
        %s338 = sand.u32 %s168, 1
        %s339 = smul.addr %s338, 8
        %s340 = scalar_lea.vmem [#allocation7], %s339
        %s341 = smul.u32 2, %s35
        %s342 = smul.u32 %s34, 2
        %s343 = sadd.s32 %s342, %s35
        %s344 = sld [smem:[#allocation4 + %s343]]
        %s345 = sadd.s32 %s344, %s36
        %s346 = sld [smem:[#allocation5 + %s343]]
        %p347 = scmp.lt.s32.totalorder %s345, %s346
        %s348 = scalar_select %p347, %s345, %s346
        %s349 = smul.u32 16, %s348
        %p350 = scmp.lt.s32.totalorder %s349, 63
        %s351 = scalar_select %p350, %s349, 63
        %s352 = smul.addr %s351, 8
        %s353 = scalar_lea.vmem %s3, %s352
        %s354 = smul.u32 %s34, 2
        %s355 = sadd.s32 %s354, %s35
        %s356 = sld [smem:[#allocation4 + %s355]]
        %s357 = sadd.s32 %s356, %s36
        %s358 = sld [smem:[#allocation5 + %s355]]
        %p359 = scmp.lt.s32.totalorder %s357, %s358
        %s360 = scalar_select %p359, %s357, %s358
        %s361 = smul.u32 16, %s360
        %s362 = smul.u32 %s34, 2
        %s363 = sadd.s32 %s362, %s35
        %s364 = sld [smem:[#allocation4 + %s363]]
        %s365 = sadd.s32 %s364, %s36
        %s366 = sld [smem:[#allocation5 + %s363]]
        %p367 = scmp.lt.s32.totalorder %s365, %s366
        %s368 = scalar_select %p367, %s365, %s366
        %p369 = scmp.lt.s32.totalorder %s34, 1
        %s370 = scalar_select %p369, %s34, 1
        %p371 = scmp.lt.s32.totalorder %s368, 3
        %s372 = scalar_select %p371, %s368, 3
        %s373 = smul.addr %s370, 4
        %s374 = sadd.s32 %s372, %s373
        %s375 = smul.addr %s374, 4
        %s376 = scalar_lea.vmem %s4, %s375
        %s377 = smul.u32 %s34, 2
        %s378 = sadd.s32 %s377, %s35
        %s379 = sld [smem:[#allocation4 + %s378]]
        %s380 = sadd.s32 %s379, %s36
        %s381 = sld [smem:[#allocation5 + %s378]]
        %p382 = scmp.lt.s32.totalorder %s380, %s381
        %s383 = scalar_select %p382, %s380, %s381
        %s384 = smul.u32 2, %s35
        %p385 = scmp.eq.s32.totalorder %s36, 0
        // Predicated region
        $region56: #{tpu_custom_call.1} parent=50 // pred_check
          %p386 = pneg %p385
        $region57: #{tpu_custom_call.1} parent=50 // pred_check_branch
          %388 = sbr.rel (%p386) target = $region59
        $region58: #{tpu_custom_call.1} parent=50 // pred_region
          %389 = vst [vmem:[#allocation2] sm:$0xff] 0.0
        $region59: #{tpu_custom_call.1} parent=50 // pred_fallthru
          _
        %s390 = smul.u32 %s34, 2
        %s391 = sadd.s32 %s390, %s35
        %s392 = sld [smem:[#allocation5 + %s391]]
        %s393 = sld [smem:[#allocation4 + %s391]]
        %s394 = ssub.s32 %s392, %s393
        %p395 = scmp.le.s32.totalorder %s36, %s394
        // Predicated region
        $region60: #{tpu_custom_call.1} parent=50 // pred_check
          %p396 = pneg %p395
        $region61: #{tpu_custom_call.1} parent=50 // pred_check_branch
          %398 = sbr.rel (%p396) target = $region63
        $region62: #{tpu_custom_call.1} parent=50 // pred_region
          %v399 = vld [vmem:[%s293] sm:$0xff]
          %v400 = vld [vmem:[%s293 + $0x8] sm:$0xff]
          %v401 = vld [vmem:[%s293 + $0x10] sm:$0xf]
          %v402 = vld [vmem:[%s293 + $0x18] sm:$0xf]
          %v403 = vld [vmem:[%s353] sm:$0xff]
          %v404 = vld [vmem:[%s353 + $0x8] sm:$0xff]
          %v405 = vld [vmem:[%s353 + $0x10] sm:$0xff]
          %v406 = vld [vmem:[%s353 + $0x18] sm:$0xff]
          %v407 = vld [vmem:[%s353 + $0x20] sm:$0xff]
          %v408 = vld [vmem:[%s353 + $0x28] sm:$0xff]
          %v409 = vld [vmem:[%s353 + $0x30] sm:$0xff]
          %v410 = vld [vmem:[%s353 + $0x38] sm:$0xff]
          %v411 = vld [vmem:[%s353 + $0x40] sm:$0xff]
          %v412 = vld [vmem:[%s353 + $0x48] sm:$0xff]
          %v413 = vld [vmem:[%s353 + $0x50] sm:$0xff]
          %v414 = vld [vmem:[%s353 + $0x58] sm:$0xff]
          %v415 = vld [vmem:[%s353 + $0x60] sm:$0xff]
          %v416 = vld [vmem:[%s353 + $0x68] sm:$0xff]
          %v417 = vld [vmem:[%s353 + $0x70] sm:$0xff]
          %v418 = vld [vmem:[%s353 + $0x78] sm:$0xff]
          %420 = vset.pattern.permute.xlu0 0
          %421 = vperm.xlu0 %420, %v403
          %v422 = vpop.permute.xlu0 %421
          %425 = vset.pattern.permute.xlu0 0
          %426 = vperm.xlu0 %425, %v404
          %v427 = vpop.permute.xlu0 %426
          %430 = vset.pattern.permute.xlu0 0
          %431 = vperm.xlu0 %430, %v405
          %v432 = vpop.permute.xlu0 %431
          %435 = vset.pattern.permute.xlu0 0
          %436 = vperm.xlu0 %435, %v406
          %v437 = vpop.permute.xlu0 %436
          %440 = vset.pattern.permute.xlu0 0
          %441 = vperm.xlu0 %440, %v407
          %v442 = vpop.permute.xlu0 %441
          %445 = vset.pattern.permute.xlu0 0
          %446 = vperm.xlu0 %445, %v408
          %v447 = vpop.permute.xlu0 %446
          %450 = vset.pattern.permute.xlu0 0
          %451 = vperm.xlu0 %450, %v409
          %v452 = vpop.permute.xlu0 %451
          %455 = vset.pattern.permute.xlu0 0
          %456 = vperm.xlu0 %455, %v410
          %v457 = vpop.permute.xlu0 %456
          %460 = vset.pattern.permute.xlu0 0
          %461 = vperm.xlu0 %460, %v411
          %v462 = vpop.permute.xlu0 %461
          %465 = vset.pattern.permute.xlu0 0
          %466 = vperm.xlu0 %465, %v412
          %v467 = vpop.permute.xlu0 %466
          %470 = vset.pattern.permute.xlu0 0
          %471 = vperm.xlu0 %470, %v413
          %v472 = vpop.permute.xlu0 %471
          %475 = vset.pattern.permute.xlu0 0
          %476 = vperm.xlu0 %475, %v414
          %v477 = vpop.permute.xlu0 %476
          %480 = vset.pattern.permute.xlu0 0
          %481 = vperm.xlu0 %480, %v415
          %v482 = vpop.permute.xlu0 %481
          %485 = vset.pattern.permute.xlu0 0
          %486 = vperm.xlu0 %485, %v416
          %v487 = vpop.permute.xlu0 %486
          %490 = vset.pattern.permute.xlu0 0
          %491 = vperm.xlu0 %490, %v417
          %v492 = vpop.permute.xlu0 %491
          %495 = vset.pattern.permute.xlu0 0
          %496 = vperm.xlu0 %495, %v418
          %v497 = vpop.permute.xlu0 %496
          %v499 = vlaneseq
          %v500 = vshrl.u32 %v499, 7
          %v501 = vsub.s32 0, %v500
          %v502 = vrot.slane %v399, %v501
          %v503 = vlaneseq
          %v504 = vshrl.u32 %v503, 7
          %v505 = vsub.s32 0, %v504
          %v506 = vrot.slane %v400, %v505
          %vm507 = vcmp.eq.f32.partialorder %v422, %v502
          %vm508 = vcmp.eq.f32.partialorder %v422, %v506
          %vm509 = vcmp.eq.f32.partialorder %v427, %v502
          %vm510 = vcmp.eq.f32.partialorder %v427, %v506
          %vm511 = vcmp.eq.f32.partialorder %v432, %v502
          %vm512 = vcmp.eq.f32.partialorder %v432, %v506
          %vm513 = vcmp.eq.f32.partialorder %v437, %v502
          %vm514 = vcmp.eq.f32.partialorder %v437, %v506
          %vm515 = vcmp.eq.f32.partialorder %v442, %v502
          %vm516 = vcmp.eq.f32.partialorder %v442, %v506
          %vm517 = vcmp.eq.f32.partialorder %v447, %v502
          %vm518 = vcmp.eq.f32.partialorder %v447, %v506
          %vm519 = vcmp.eq.f32.partialorder %v452, %v502
          %vm520 = vcmp.eq.f32.partialorder %v452, %v506
          %vm521 = vcmp.eq.f32.partialorder %v457, %v502
          %vm522 = vcmp.eq.f32.partialorder %v457, %v506
          %vm523 = vcmp.eq.f32.partialorder %v462, %v502
          %vm524 = vcmp.eq.f32.partialorder %v462, %v506
          %vm525 = vcmp.eq.f32.partialorder %v467, %v502
          %vm526 = vcmp.eq.f32.partialorder %v467, %v506
          %vm527 = vcmp.eq.f32.partialorder %v472, %v502
          %vm528 = vcmp.eq.f32.partialorder %v472, %v506
          %vm529 = vcmp.eq.f32.partialorder %v477, %v502
          %vm530 = vcmp.eq.f32.partialorder %v477, %v506
          %vm531 = vcmp.eq.f32.partialorder %v482, %v502
          %vm532 = vcmp.eq.f32.partialorder %v482, %v506
          %vm533 = vcmp.eq.f32.partialorder %v487, %v502
          %vm534 = vcmp.eq.f32.partialorder %v487, %v506
          %vm535 = vcmp.eq.f32.partialorder %v492, %v502
          %vm536 = vcmp.eq.f32.partialorder %v492, %v506
          %vm537 = vcmp.eq.f32.partialorder %v497, %v502
          %vm538 = vcmp.eq.f32.partialorder %v497, %v506
          %v539 = vlaneseq
          %v540 = vshrl.u32 %v539, 7
          %v541 = vsub.s32 1, %v540
          %v542 = vrot.slane %v399, %v541
          %v543 = vlaneseq
          %v544 = vshrl.u32 %v543, 7
          %v545 = vsub.s32 1, %v544
          %v546 = vrot.slane %v400, %v545
          %vm547 = vcmp.eq.f32.partialorder %v422, %v542
          %vm548 = vcmp.eq.f32.partialorder %v422, %v546
          %vm549 = vcmp.eq.f32.partialorder %v427, %v542
          %vm550 = vcmp.eq.f32.partialorder %v427, %v546
          %vm551 = vcmp.eq.f32.partialorder %v432, %v542
          %vm552 = vcmp.eq.f32.partialorder %v432, %v546
          %vm553 = vcmp.eq.f32.partialorder %v437, %v542
          %vm554 = vcmp.eq.f32.partialorder %v437, %v546
          %vm555 = vcmp.eq.f32.partialorder %v442, %v542
          %vm556 = vcmp.eq.f32.partialorder %v442, %v546
          %vm557 = vcmp.eq.f32.partialorder %v447, %v542
          %vm558 = vcmp.eq.f32.partialorder %v447, %v546
          %vm559 = vcmp.eq.f32.partialorder %v452, %v542
          %vm560 = vcmp.eq.f32.partialorder %v452, %v546
          %vm561 = vcmp.eq.f32.partialorder %v457, %v542
          %vm562 = vcmp.eq.f32.partialorder %v457, %v546
          %vm563 = vcmp.eq.f32.partialorder %v462, %v542
          %vm564 = vcmp.eq.f32.partialorder %v462, %v546
          %vm565 = vcmp.eq.f32.partialorder %v467, %v542
          %vm566 = vcmp.eq.f32.partialorder %v467, %v546
          %vm567 = vcmp.eq.f32.partialorder %v472, %v542
          %vm568 = vcmp.eq.f32.partialorder %v472, %v546
          %vm569 = vcmp.eq.f32.partialorder %v477, %v542
          %vm570 = vcmp.eq.f32.partialorder %v477, %v546
          %vm571 = vcmp.eq.f32.partialorder %v482, %v542
          %vm572 = vcmp.eq.f32.partialorder %v482, %v546
          %vm573 = vcmp.eq.f32.partialorder %v487, %v542
          %vm574 = vcmp.eq.f32.partialorder %v487, %v546
          %vm575 = vcmp.eq.f32.partialorder %v492, %v542
          %vm576 = vcmp.eq.f32.partialorder %v492, %v546
          %vm577 = vcmp.eq.f32.partialorder %v497, %v542
          %vm578 = vcmp.eq.f32.partialorder %v497, %v546
          %v579 = vlaneseq
          %v580 = vshrl.u32 %v579, 7
          %v581 = vsub.s32 7, %v580
          %v582 = vrot.slane %v399, %v581
          %v583 = vlaneseq
          %v584 = vshrl.u32 %v583, 7
          %v585 = vsub.s32 7, %v584
          %v586 = vrot.slane %v400, %v585
          %v587 = vsel %vm547, %v582, 0.0
          %v588 = vsel %vm548, %v586, 0.0
          %v589 = vsel %vm549, %v582, 0.0
          %v590 = vsel %vm550, %v586, 0.0
          %v591 = vsel %vm551, %v582, 0.0
          %v592 = vsel %vm552, %v586, 0.0
          %v593 = vsel %vm553, %v582, 0.0
          %v594 = vsel %vm554, %v586, 0.0
          %v595 = vsel %vm555, %v582, 0.0
          %v596 = vsel %vm556, %v586, 0.0
          %v597 = vsel %vm557, %v582, 0.0
          %v598 = vsel %vm558, %v586, 0.0
          %v599 = vsel %vm559, %v582, 0.0
          %v600 = vsel %vm560, %v586, 0.0
          %v601 = vsel %vm561, %v582, 0.0
          %v602 = vsel %vm562, %v586, 0.0
          %v603 = vsel %vm563, %v582, 0.0
          %v604 = vsel %vm564, %v586, 0.0
          %v605 = vsel %vm565, %v582, 0.0
          %v606 = vsel %vm566, %v586, 0.0
          %v607 = vsel %vm567, %v582, 0.0
          %v608 = vsel %vm568, %v586, 0.0
          %v609 = vsel %vm569, %v582, 0.0
          %v610 = vsel %vm570, %v586, 0.0
          %v611 = vsel %vm571, %v582, 0.0
          %v612 = vsel %vm572, %v586, 0.0
          %v613 = vsel %vm573, %v582, 0.0
          %v614 = vsel %vm574, %v586, 0.0
          %v615 = vsel %vm575, %v582, 0.0
          %v616 = vsel %vm576, %v586, 0.0
          %v617 = vsel %vm577, %v582, 0.0
          %v618 = vsel %vm578, %v586, 0.0
          %v619 = vlaneseq
          %v620 = vshrl.u32 %v619, 7
          %v621 = vsub.s32 6, %v620
          %v622 = vrot.slane %v399, %v621
          %v623 = vlaneseq
          %v624 = vshrl.u32 %v623, 7
          %v625 = vsub.s32 6, %v624
          %v626 = vrot.slane %v400, %v625
          %v627 = vsel %vm507, %v622, %v587
          %v628 = vsel %vm508, %v626, %v588
          %v629 = vsel %vm509, %v622, %v589
          %v630 = vsel %vm510, %v626, %v590
          %v631 = vsel %vm511, %v622, %v591
          %v632 = vsel %vm512, %v626, %v592
          %v633 = vsel %vm513, %v622, %v593
          %v634 = vsel %vm514, %v626, %v594
          %v635 = vsel %vm515, %v622, %v595
          %v636 = vsel %vm516, %v626, %v596
          %v637 = vsel %vm517, %v622, %v597
          %v638 = vsel %vm518, %v626, %v598
          %v639 = vsel %vm519, %v622, %v599
          %v640 = vsel %vm520, %v626, %v600
          %v641 = vsel %vm521, %v622, %v601
          %v642 = vsel %vm522, %v626, %v602
          %v643 = vsel %vm523, %v622, %v603
          %v644 = vsel %vm524, %v626, %v604
          %v645 = vsel %vm525, %v622, %v605
          %v646 = vsel %vm526, %v626, %v606
          %v647 = vsel %vm527, %v622, %v607
          %v648 = vsel %vm528, %v626, %v608
          %v649 = vsel %vm529, %v622, %v609
          %v650 = vsel %vm530, %v626, %v610
          %v651 = vsel %vm531, %v622, %v611
          %v652 = vsel %vm532, %v626, %v612
          %v653 = vsel %vm533, %v622, %v613
          %v654 = vsel %vm534, %v626, %v614
          %v655 = vsel %vm535, %v622, %v615
          %v656 = vsel %vm536, %v626, %v616
          %v657 = vsel %vm537, %v622, %v617
          %v658 = vsel %vm538, %v626, %v618
          %659 = vset.pattern.permute.xlu0 1
          %660 = vperm.xlu0 %659, %v403
          %v661 = vpop.permute.xlu0 %660
          %663 = vset.pattern.permute.xlu0 1
          %664 = vperm.xlu0 %663, %v404
          %v665 = vpop.permute.xlu0 %664
          %667 = vset.pattern.permute.xlu0 1
          %668 = vperm.xlu0 %667, %v405
          %v669 = vpop.permute.xlu0 %668
          %671 = vset.pattern.permute.xlu0 1
          %672 = vperm.xlu0 %671, %v406
          %v673 = vpop.permute.xlu0 %672
          %675 = vset.pattern.permute.xlu0 1
          %676 = vperm.xlu0 %675, %v407
          %v677 = vpop.permute.xlu0 %676
          %679 = vset.pattern.permute.xlu0 1
          %680 = vperm.xlu0 %679, %v408
          %v681 = vpop.permute.xlu0 %680
          %683 = vset.pattern.permute.xlu0 1
          %684 = vperm.xlu0 %683, %v409
          %v685 = vpop.permute.xlu0 %684
          %687 = vset.pattern.permute.xlu0 1
          %688 = vperm.xlu0 %687, %v410
          %v689 = vpop.permute.xlu0 %688
          %691 = vset.pattern.permute.xlu0 1
          %692 = vperm.xlu0 %691, %v411
          %v693 = vpop.permute.xlu0 %692
          %695 = vset.pattern.permute.xlu0 1
          %696 = vperm.xlu0 %695, %v412
          %v697 = vpop.permute.xlu0 %696
          %699 = vset.pattern.permute.xlu0 1
          %700 = vperm.xlu0 %699, %v413
          %v701 = vpop.permute.xlu0 %700
          %703 = vset.pattern.permute.xlu0 1
          %704 = vperm.xlu0 %703, %v414
          %v705 = vpop.permute.xlu0 %704
          %707 = vset.pattern.permute.xlu0 1
          %708 = vperm.xlu0 %707, %v415
          %v709 = vpop.permute.xlu0 %708
          %711 = vset.pattern.permute.xlu0 1
          %712 = vperm.xlu0 %711, %v416
          %v713 = vpop.permute.xlu0 %712
          %715 = vset.pattern.permute.xlu0 1
          %716 = vperm.xlu0 %715, %v417
          %v717 = vpop.permute.xlu0 %716
          %719 = vset.pattern.permute.xlu0 1
          %720 = vperm.xlu0 %719, %v418
          %v721 = vpop.permute.xlu0 %720
          %v723 = vlaneseq
          %v724 = vshrl.u32 %v723, 7
          %v725 = vsub.s32 2, %v724
          %v726 = vrot.slane %v399, %v725
          %v727 = vlaneseq
          %v728 = vshrl.u32 %v727, 7
          %v729 = vsub.s32 2, %v728
          %v730 = vrot.slane %v400, %v729
          %vm731 = vcmp.eq.f32.partialorder %v661, %v726
          %vm732 = vcmp.eq.f32.partialorder %v661, %v730
          %vm733 = vcmp.eq.f32.partialorder %v665, %v726
          %vm734 = vcmp.eq.f32.partialorder %v665, %v730
          %vm735 = vcmp.eq.f32.partialorder %v669, %v726
          %vm736 = vcmp.eq.f32.partialorder %v669, %v730
          %vm737 = vcmp.eq.f32.partialorder %v673, %v726
          %vm738 = vcmp.eq.f32.partialorder %v673, %v730
          %vm739 = vcmp.eq.f32.partialorder %v677, %v726
          %vm740 = vcmp.eq.f32.partialorder %v677, %v730
          %vm741 = vcmp.eq.f32.partialorder %v681, %v726
          %vm742 = vcmp.eq.f32.partialorder %v681, %v730
          %vm743 = vcmp.eq.f32.partialorder %v685, %v726
          %vm744 = vcmp.eq.f32.partialorder %v685, %v730
          %vm745 = vcmp.eq.f32.partialorder %v689, %v726
          %vm746 = vcmp.eq.f32.partialorder %v689, %v730
          %vm747 = vcmp.eq.f32.partialorder %v693, %v726
          %vm748 = vcmp.eq.f32.partialorder %v693, %v730
          %vm749 = vcmp.eq.f32.partialorder %v697, %v726
          %vm750 = vcmp.eq.f32.partialorder %v697, %v730
          %vm751 = vcmp.eq.f32.partialorder %v701, %v726
          %vm752 = vcmp.eq.f32.partialorder %v701, %v730
          %vm753 = vcmp.eq.f32.partialorder %v705, %v726
          %vm754 = vcmp.eq.f32.partialorder %v705, %v730
          %vm755 = vcmp.eq.f32.partialorder %v709, %v726
          %vm756 = vcmp.eq.f32.partialorder %v709, %v730
          %vm757 = vcmp.eq.f32.partialorder %v713, %v726
          %vm758 = vcmp.eq.f32.partialorder %v713, %v730
          %vm759 = vcmp.eq.f32.partialorder %v717, %v726
          %vm760 = vcmp.eq.f32.partialorder %v717, %v730
          %vm761 = vcmp.eq.f32.partialorder %v721, %v726
          %vm762 = vcmp.eq.f32.partialorder %v721, %v730
          %v763 = vlaneseq
          %v764 = vshrl.u32 %v763, 7
          %v765 = vsub.s32 3, %v764
          %v766 = vrot.slane %v399, %v765
          %v767 = vlaneseq
          %v768 = vshrl.u32 %v767, 7
          %v769 = vsub.s32 3, %v768
          %v770 = vrot.slane %v400, %v769
          %vm771 = vcmp.eq.f32.partialorder %v661, %v766
          %vm772 = vcmp.eq.f32.partialorder %v661, %v770
          %vm773 = vcmp.eq.f32.partialorder %v665, %v766
          %vm774 = vcmp.eq.f32.partialorder %v665, %v770
          %vm775 = vcmp.eq.f32.partialorder %v669, %v766
          %vm776 = vcmp.eq.f32.partialorder %v669, %v770
          %vm777 = vcmp.eq.f32.partialorder %v673, %v766
          %vm778 = vcmp.eq.f32.partialorder %v673, %v770
          %vm779 = vcmp.eq.f32.partialorder %v677, %v766
          %vm780 = vcmp.eq.f32.partialorder %v677, %v770
          %vm781 = vcmp.eq.f32.partialorder %v681, %v766
          %vm782 = vcmp.eq.f32.partialorder %v681, %v770
          %vm783 = vcmp.eq.f32.partialorder %v685, %v766
          %vm784 = vcmp.eq.f32.partialorder %v685, %v770
          %vm785 = vcmp.eq.f32.partialorder %v689, %v766
          %vm786 = vcmp.eq.f32.partialorder %v689, %v770
          %vm787 = vcmp.eq.f32.partialorder %v693, %v766
          %vm788 = vcmp.eq.f32.partialorder %v693, %v770
          %vm789 = vcmp.eq.f32.partialorder %v697, %v766
          %vm790 = vcmp.eq.f32.partialorder %v697, %v770
          %vm791 = vcmp.eq.f32.partialorder %v701, %v766
          %vm792 = vcmp.eq.f32.partialorder %v701, %v770
          %vm793 = vcmp.eq.f32.partialorder %v705, %v766
          %vm794 = vcmp.eq.f32.partialorder %v705, %v770
          %vm795 = vcmp.eq.f32.partialorder %v709, %v766
          %vm796 = vcmp.eq.f32.partialorder %v709, %v770
          %vm797 = vcmp.eq.f32.partialorder %v713, %v766
          %vm798 = vcmp.eq.f32.partialorder %v713, %v770
          %vm799 = vcmp.eq.f32.partialorder %v717, %v766
          %vm800 = vcmp.eq.f32.partialorder %v717, %v770
          %vm801 = vcmp.eq.f32.partialorder %v721, %v766
          %vm802 = vcmp.eq.f32.partialorder %v721, %v770
          %v803 = vlaneseq
          %v804 = vshrl.u32 %v803, 7
          %v805 = vsub.s32 1, %v804
          %v806 = vrot.slane %v401, %v805
          %v807 = vlaneseq
          %v808 = vshrl.u32 %v807, 7
          %v809 = vsub.s32 1, %v808
          %v810 = vrot.slane %v402, %v809
          %v811 = vsel %vm771, %v806, 0.0
          %v812 = vsel %vm772, %v810, 0.0
          %v813 = vsel %vm773, %v806, 0.0
          %v814 = vsel %vm774, %v810, 0.0
          %v815 = vsel %vm775, %v806, 0.0
          %v816 = vsel %vm776, %v810, 0.0
          %v817 = vsel %vm777, %v806, 0.0
          %v818 = vsel %vm778, %v810, 0.0
          %v819 = vsel %vm779, %v806, 0.0
          %v820 = vsel %vm780, %v810, 0.0
          %v821 = vsel %vm781, %v806, 0.0
          %v822 = vsel %vm782, %v810, 0.0
          %v823 = vsel %vm783, %v806, 0.0
          %v824 = vsel %vm784, %v810, 0.0
          %v825 = vsel %vm785, %v806, 0.0
          %v826 = vsel %vm786, %v810, 0.0
          %v827 = vsel %vm787, %v806, 0.0
          %v828 = vsel %vm788, %v810, 0.0
          %v829 = vsel %vm789, %v806, 0.0
          %v830 = vsel %vm790, %v810, 0.0
          %v831 = vsel %vm791, %v806, 0.0
          %v832 = vsel %vm792, %v810, 0.0
          %v833 = vsel %vm793, %v806, 0.0
          %v834 = vsel %vm794, %v810, 0.0
          %v835 = vsel %vm795, %v806, 0.0
          %v836 = vsel %vm796, %v810, 0.0
          %v837 = vsel %vm797, %v806, 0.0
          %v838 = vsel %vm798, %v810, 0.0
          %v839 = vsel %vm799, %v806, 0.0
          %v840 = vsel %vm800, %v810, 0.0
          %v841 = vsel %vm801, %v806, 0.0
          %v842 = vsel %vm802, %v810, 0.0
          %v843 = vlaneseq
          %v844 = vshrl.u32 %v843, 7
          %v845 = vsub.s32 0, %v844
          %v846 = vrot.slane %v401, %v845
          %v847 = vlaneseq
          %v848 = vshrl.u32 %v847, 7
          %v849 = vsub.s32 0, %v848
          %v850 = vrot.slane %v402, %v849
          %v851 = vsel %vm731, %v846, %v811
          %v852 = vsel %vm732, %v850, %v812
          %v853 = vsel %vm733, %v846, %v813
          %v854 = vsel %vm734, %v850, %v814
          %v855 = vsel %vm735, %v846, %v815
          %v856 = vsel %vm736, %v850, %v816
          %v857 = vsel %vm737, %v846, %v817
          %v858 = vsel %vm738, %v850, %v818
          %v859 = vsel %vm739, %v846, %v819
          %v860 = vsel %vm740, %v850, %v820
          %v861 = vsel %vm741, %v846, %v821
          %v862 = vsel %vm742, %v850, %v822
          %v863 = vsel %vm743, %v846, %v823
          %v864 = vsel %vm744, %v850, %v824
          %v865 = vsel %vm745, %v846, %v825
          %v866 = vsel %vm746, %v850, %v826
          %v867 = vsel %vm747, %v846, %v827
          %v868 = vsel %vm748, %v850, %v828
          %v869 = vsel %vm749, %v846, %v829
          %v870 = vsel %vm750, %v850, %v830
          %v871 = vsel %vm751, %v846, %v831
          %v872 = vsel %vm752, %v850, %v832
          %v873 = vsel %vm753, %v846, %v833
          %v874 = vsel %vm754, %v850, %v834
          %v875 = vsel %vm755, %v846, %v835
          %v876 = vsel %vm756, %v850, %v836
          %v877 = vsel %vm757, %v846, %v837
          %v878 = vsel %vm758, %v850, %v838
          %v879 = vsel %vm759, %v846, %v839
          %v880 = vsel %vm760, %v850, %v840
          %v881 = vsel %vm761, %v846, %v841
          %v882 = vsel %vm762, %v850, %v842
          %883 = vset.pattern.permute.xlu0 2
          %884 = vperm.xlu0 %883, %v403
          %v885 = vpop.permute.xlu0 %884
          %887 = vset.pattern.permute.xlu0 2
          %888 = vperm.xlu0 %887, %v404
          %v889 = vpop.permute.xlu0 %888
          %891 = vset.pattern.permute.xlu0 2
          %892 = vperm.xlu0 %891, %v405
          %v893 = vpop.permute.xlu0 %892
          %895 = vset.pattern.permute.xlu0 2
          %896 = vperm.xlu0 %895, %v406
          %v897 = vpop.permute.xlu0 %896
          %899 = vset.pattern.permute.xlu0 2
          %900 = vperm.xlu0 %899, %v407
          %v901 = vpop.permute.xlu0 %900
          %903 = vset.pattern.permute.xlu0 2
          %904 = vperm.xlu0 %903, %v408
          %v905 = vpop.permute.xlu0 %904
          %907 = vset.pattern.permute.xlu0 2
          %908 = vperm.xlu0 %907, %v409
          %v909 = vpop.permute.xlu0 %908
          %911 = vset.pattern.permute.xlu0 2
          %912 = vperm.xlu0 %911, %v410
          %v913 = vpop.permute.xlu0 %912
          %915 = vset.pattern.permute.xlu0 2
          %916 = vperm.xlu0 %915, %v411
          %v917 = vpop.permute.xlu0 %916
          %919 = vset.pattern.permute.xlu0 2
          %920 = vperm.xlu0 %919, %v412
          %v921 = vpop.permute.xlu0 %920
          %923 = vset.pattern.permute.xlu0 2
          %924 = vperm.xlu0 %923, %v413
          %v925 = vpop.permute.xlu0 %924
          %927 = vset.pattern.permute.xlu0 2
          %928 = vperm.xlu0 %927, %v414
          %v929 = vpop.permute.xlu0 %928
          %931 = vset.pattern.permute.xlu0 2
          %932 = vperm.xlu0 %931, %v415
          %v933 = vpop.permute.xlu0 %932
          %935 = vset.pattern.permute.xlu0 2
          %936 = vperm.xlu0 %935, %v416
          %v937 = vpop.permute.xlu0 %936
          %939 = vset.pattern.permute.xlu0 2
          %940 = vperm.xlu0 %939, %v417
          %v941 = vpop.permute.xlu0 %940
          %943 = vset.pattern.permute.xlu0 2
          %944 = vperm.xlu0 %943, %v418
          %v945 = vpop.permute.xlu0 %944
          %v947 = vlaneseq
          %v948 = vshrl.u32 %v947, 7
          %v949 = vsub.s32 4, %v948
          %v950 = vrot.slane %v399, %v949
          %v951 = vlaneseq
          %v952 = vshrl.u32 %v951, 7
          %v953 = vsub.s32 4, %v952
          %v954 = vrot.slane %v400, %v953
          %vm955 = vcmp.eq.f32.partialorder %v885, %v950
          %vm956 = vcmp.eq.f32.partialorder %v885, %v954
          %vm957 = vcmp.eq.f32.partialorder %v889, %v950
          %vm958 = vcmp.eq.f32.partialorder %v889, %v954
          %vm959 = vcmp.eq.f32.partialorder %v893, %v950
          %vm960 = vcmp.eq.f32.partialorder %v893, %v954
          %vm961 = vcmp.eq.f32.partialorder %v897, %v950
          %vm962 = vcmp.eq.f32.partialorder %v897, %v954
          %vm963 = vcmp.eq.f32.partialorder %v901, %v950
          %vm964 = vcmp.eq.f32.partialorder %v901, %v954
          %vm965 = vcmp.eq.f32.partialorder %v905, %v950
          %vm966 = vcmp.eq.f32.partialorder %v905, %v954
          %vm967 = vcmp.eq.f32.partialorder %v909, %v950
          %vm968 = vcmp.eq.f32.partialorder %v909, %v954
          %vm969 = vcmp.eq.f32.partialorder %v913, %v950
          %vm970 = vcmp.eq.f32.partialorder %v913, %v954
          %vm971 = vcmp.eq.f32.partialorder %v917, %v950
          %vm972 = vcmp.eq.f32.partialorder %v917, %v954
          %vm973 = vcmp.eq.f32.partialorder %v921, %v950
          %vm974 = vcmp.eq.f32.partialorder %v921, %v954
          %vm975 = vcmp.eq.f32.partialorder %v925, %v950
          %vm976 = vcmp.eq.f32.partialorder %v925, %v954
          %vm977 = vcmp.eq.f32.partialorder %v929, %v950
          %vm978 = vcmp.eq.f32.partialorder %v929, %v954
          %vm979 = vcmp.eq.f32.partialorder %v933, %v950
          %vm980 = vcmp.eq.f32.partialorder %v933, %v954
          %vm981 = vcmp.eq.f32.partialorder %v937, %v950
          %vm982 = vcmp.eq.f32.partialorder %v937, %v954
          %vm983 = vcmp.eq.f32.partialorder %v941, %v950
          %vm984 = vcmp.eq.f32.partialorder %v941, %v954
          %vm985 = vcmp.eq.f32.partialorder %v945, %v950
          %vm986 = vcmp.eq.f32.partialorder %v945, %v954
          %v987 = vlaneseq
          %v988 = vshrl.u32 %v987, 7
          %v989 = vsub.s32 5, %v988
          %v990 = vrot.slane %v399, %v989
          %v991 = vlaneseq
          %v992 = vshrl.u32 %v991, 7
          %v993 = vsub.s32 5, %v992
          %v994 = vrot.slane %v400, %v993
          %vm995 = vcmp.eq.f32.partialorder %v885, %v990
          %vm996 = vcmp.eq.f32.partialorder %v885, %v994
          %vm997 = vcmp.eq.f32.partialorder %v889, %v990
          %vm998 = vcmp.eq.f32.partialorder %v889, %v994
          %vm999 = vcmp.eq.f32.partialorder %v893, %v990
          %vm1000 = vcmp.eq.f32.partialorder %v893, %v994
          %vm1001 = vcmp.eq.f32.partialorder %v897, %v990
          %vm1002 = vcmp.eq.f32.partialorder %v897, %v994
          %vm1003 = vcmp.eq.f32.partialorder %v901, %v990
          %vm1004 = vcmp.eq.f32.partialorder %v901, %v994
          %vm1005 = vcmp.eq.f32.partialorder %v905, %v990
          %vm1006 = vcmp.eq.f32.partialorder %v905, %v994
          %vm1007 = vcmp.eq.f32.partialorder %v909, %v990
          %vm1008 = vcmp.eq.f32.partialorder %v909, %v994
          %vm1009 = vcmp.eq.f32.partialorder %v913, %v990
          %vm1010 = vcmp.eq.f32.partialorder %v913, %v994
          %vm1011 = vcmp.eq.f32.partialorder %v917, %v990
          %vm1012 = vcmp.eq.f32.partialorder %v917, %v994
          %vm1013 = vcmp.eq.f32.partialorder %v921, %v990
          %vm1014 = vcmp.eq.f32.partialorder %v921, %v994
          %vm1015 = vcmp.eq.f32.partialorder %v925, %v990
          %vm1016 = vcmp.eq.f32.partialorder %v925, %v994
          %vm1017 = vcmp.eq.f32.partialorder %v929, %v990
          %vm1018 = vcmp.eq.f32.partialorder %v929, %v994
          %vm1019 = vcmp.eq.f32.partialorder %v933, %v990
          %vm1020 = vcmp.eq.f32.partialorder %v933, %v994
          %vm1021 = vcmp.eq.f32.partialorder %v937, %v990
          %vm1022 = vcmp.eq.f32.partialorder %v937, %v994
          %vm1023 = vcmp.eq.f32.partialorder %v941, %v990
          %vm1024 = vcmp.eq.f32.partialorder %v941, %v994
          %vm1025 = vcmp.eq.f32.partialorder %v945, %v990
          %vm1026 = vcmp.eq.f32.partialorder %v945, %v994
          %v1027 = vlaneseq
          %v1028 = vshrl.u32 %v1027, 7
          %v1029 = vsub.s32 3, %v1028
          %v1030 = vrot.slane %v401, %v1029
          %v1031 = vlaneseq
          %v1032 = vshrl.u32 %v1031, 7
          %v1033 = vsub.s32 3, %v1032
          %v1034 = vrot.slane %v402, %v1033
          %v1035 = vsel %vm995, %v1030, 0.0
          %v1036 = vsel %vm996, %v1034, 0.0
          %v1037 = vsel %vm997, %v1030, 0.0
          %v1038 = vsel %vm998, %v1034, 0.0
          %v1039 = vsel %vm999, %v1030, 0.0
          %v1040 = vsel %vm1000, %v1034, 0.0
          %v1041 = vsel %vm1001, %v1030, 0.0
          %v1042 = vsel %vm1002, %v1034, 0.0
          %v1043 = vsel %vm1003, %v1030, 0.0
          %v1044 = vsel %vm1004, %v1034, 0.0
          %v1045 = vsel %vm1005, %v1030, 0.0
          %v1046 = vsel %vm1006, %v1034, 0.0
          %v1047 = vsel %vm1007, %v1030, 0.0
          %v1048 = vsel %vm1008, %v1034, 0.0
          %v1049 = vsel %vm1009, %v1030, 0.0
          %v1050 = vsel %vm1010, %v1034, 0.0
          %v1051 = vsel %vm1011, %v1030, 0.0
          %v1052 = vsel %vm1012, %v1034, 0.0
          %v1053 = vsel %vm1013, %v1030, 0.0
          %v1054 = vsel %vm1014, %v1034, 0.0
          %v1055 = vsel %vm1015, %v1030, 0.0
          %v1056 = vsel %vm1016, %v1034, 0.0
          %v1057 = vsel %vm1017, %v1030, 0.0
          %v1058 = vsel %vm1018, %v1034, 0.0
          %v1059 = vsel %vm1019, %v1030, 0.0
          %v1060 = vsel %vm1020, %v1034, 0.0
          %v1061 = vsel %vm1021, %v1030, 0.0
          %v1062 = vsel %vm1022, %v1034, 0.0
          %v1063 = vsel %vm1023, %v1030, 0.0
          %v1064 = vsel %vm1024, %v1034, 0.0
          %v1065 = vsel %vm1025, %v1030, 0.0
          %v1066 = vsel %vm1026, %v1034, 0.0
          %v1067 = vlaneseq
          %v1068 = vshrl.u32 %v1067, 7
          %v1069 = vsub.s32 2, %v1068
          %v1070 = vrot.slane %v401, %v1069
          %v1071 = vlaneseq
          %v1072 = vshrl.u32 %v1071, 7
          %v1073 = vsub.s32 2, %v1072
          %v1074 = vrot.slane %v402, %v1073
          %v1075 = vsel %vm955, %v1070, %v1035
          %v1076 = vsel %vm956, %v1074, %v1036
          %v1077 = vsel %vm957, %v1070, %v1037
          %v1078 = vsel %vm958, %v1074, %v1038
          %v1079 = vsel %vm959, %v1070, %v1039
          %v1080 = vsel %vm960, %v1074, %v1040
          %v1081 = vsel %vm961, %v1070, %v1041
          %v1082 = vsel %vm962, %v1074, %v1042
          %v1083 = vsel %vm963, %v1070, %v1043
          %v1084 = vsel %vm964, %v1074, %v1044
          %v1085 = vsel %vm965, %v1070, %v1045
          %v1086 = vsel %vm966, %v1074, %v1046
          %v1087 = vsel %vm967, %v1070, %v1047
          %v1088 = vsel %vm968, %v1074, %v1048
          %v1089 = vsel %vm969, %v1070, %v1049
          %v1090 = vsel %vm970, %v1074, %v1050
          %v1091 = vsel %vm971, %v1070, %v1051
          %v1092 = vsel %vm972, %v1074, %v1052
          %v1093 = vsel %vm973, %v1070, %v1053
          %v1094 = vsel %vm974, %v1074, %v1054
          %v1095 = vsel %vm975, %v1070, %v1055
          %v1096 = vsel %vm976, %v1074, %v1056
          %v1097 = vsel %vm977, %v1070, %v1057
          %v1098 = vsel %vm978, %v1074, %v1058
          %v1099 = vsel %vm979, %v1070, %v1059
          %v1100 = vsel %vm980, %v1074, %v1060
          %v1101 = vsel %vm981, %v1070, %v1061
          %v1102 = vsel %vm982, %v1074, %v1062
          %v1103 = vsel %vm983, %v1070, %v1063
          %v1104 = vsel %vm984, %v1074, %v1064
          %v1105 = vsel %vm985, %v1070, %v1065
          %v1106 = vsel %vm986, %v1074, %v1066
          %v1107 = vmul.f32 %v1075, %v851
          %v1108 = vmul.f32 %v1076, %v852
          %v1109 = vmul.f32 %v1077, %v853
          %v1110 = vmul.f32 %v1078, %v854
          %v1111 = vmul.f32 %v1079, %v855
          %v1112 = vmul.f32 %v1080, %v856
          %v1113 = vmul.f32 %v1081, %v857
          %v1114 = vmul.f32 %v1082, %v858
          %v1115 = vmul.f32 %v1083, %v859
          %v1116 = vmul.f32 %v1084, %v860
          %v1117 = vmul.f32 %v1085, %v861
          %v1118 = vmul.f32 %v1086, %v862
          %v1119 = vmul.f32 %v1087, %v863
          %v1120 = vmul.f32 %v1088, %v864
          %v1121 = vmul.f32 %v1089, %v865
          %v1122 = vmul.f32 %v1090, %v866
          %v1123 = vmul.f32 %v1091, %v867
          %v1124 = vmul.f32 %v1092, %v868
          %v1125 = vmul.f32 %v1093, %v869
          %v1126 = vmul.f32 %v1094, %v870
          %v1127 = vmul.f32 %v1095, %v871
          %v1128 = vmul.f32 %v1096, %v872
          %v1129 = vmul.f32 %v1097, %v873
          %v1130 = vmul.f32 %v1098, %v874
          %v1131 = vmul.f32 %v1099, %v875
          %v1132 = vmul.f32 %v1100, %v876
          %v1133 = vmul.f32 %v1101, %v877
          %v1134 = vmul.f32 %v1102, %v878
          %v1135 = vmul.f32 %v1103, %v879
          %v1136 = vmul.f32 %v1104, %v880
          %v1137 = vmul.f32 %v1105, %v881
          %v1138 = vmul.f32 %v1106, %v882
          %v1139 = vmul.f32 %v1107, %v627
          %v1140 = vmul.f32 %v1108, %v628
          %v1141 = vmul.f32 %v1109, %v629
          %v1142 = vmul.f32 %v1110, %v630
          %v1143 = vmul.f32 %v1111, %v631
          %v1144 = vmul.f32 %v1112, %v632
          %v1145 = vmul.f32 %v1113, %v633
          %v1146 = vmul.f32 %v1114, %v634
          %v1147 = vmul.f32 %v1115, %v635
          %v1148 = vmul.f32 %v1116, %v636
          %v1149 = vmul.f32 %v1117, %v637
          %v1150 = vmul.f32 %v1118, %v638
          %v1151 = vmul.f32 %v1119, %v639
          %v1152 = vmul.f32 %v1120, %v640
          %v1153 = vmul.f32 %v1121, %v641
          %v1154 = vmul.f32 %v1122, %v642
          %v1155 = vmul.f32 %v1123, %v643
          %v1156 = vmul.f32 %v1124, %v644
          %v1157 = vmul.f32 %v1125, %v645
          %v1158 = vmul.f32 %v1126, %v646
          %v1159 = vmul.f32 %v1127, %v647
          %v1160 = vmul.f32 %v1128, %v648
          %v1161 = vmul.f32 %v1129, %v649
          %v1162 = vmul.f32 %v1130, %v650
          %v1163 = vmul.f32 %v1131, %v651
          %v1164 = vmul.f32 %v1132, %v652
          %v1165 = vmul.f32 %v1133, %v653
          %v1166 = vmul.f32 %v1134, %v654
          %v1167 = vmul.f32 %v1135, %v655
          %v1168 = vmul.f32 %v1136, %v656
          %v1169 = vmul.f32 %v1137, %v657
          %v1170 = vmul.f32 %v1138, %v658
          %v1171 = vld [vmem:[%s376] sm:$0xf]
          %v1172 = vld [vmem:[#allocation2] sm:$0xff]
          %1173 = vmatprep.subr.mxu0 %v1140
          %1174 = vmatpush1.msra.mxu0 %v1139
          %1175 = vmatprep.subr.mxu0 %v1142
          %1176 = vmatpush1.msra.mxu0 %v1141
          %1177 = vmatprep.subr.mxu0 %v1144
          %1178 = vmatpush1.msra.mxu0 %v1143
          %1179 = vmatprep.subr.mxu0 %v1146
          %1180 = vmatpush1.msra.mxu0 %v1145
          %1181 = vmatprep.subr.mxu0 %v1148
          %1182 = vmatpush1.msra.mxu0 %v1147
          %1183 = vmatprep.subr.mxu0 %v1150
          %1184 = vmatpush1.msra.mxu0 %v1149
          %1185 = vmatprep.subr.mxu0 %v1152
          %1186 = vmatpush1.msra.mxu0 %v1151
          %1187 = vmatprep.subr.mxu0 %v1154
          %1188 = vmatpush1.msra.mxu0 %v1153
          %1189 = vmatprep.subr.mxu0 %v1156
          %1190 = vmatpush1.msra.mxu0 %v1155
          %1191 = vmatprep.subr.mxu0 %v1158
          %1192 = vmatpush1.msra.mxu0 %v1157
          %1193 = vmatprep.subr.mxu0 %v1160
          %1194 = vmatpush1.msra.mxu0 %v1159
          %1195 = vmatprep.subr.mxu0 %v1162
          %1196 = vmatpush1.msra.mxu0 %v1161
          %1197 = vmatprep.subr.mxu0 %v1164
          %1198 = vmatpush1.msra.mxu0 %v1163
          %1199 = vmatprep.subr.mxu0 %v1166
          %1200 = vmatpush1.msra.mxu0 %v1165
          %1201 = vmatprep.subr.mxu0 %v1168
          %1202 = vmatpush1.msra.mxu0 %v1167
          %1203 = vmatprep.subr.mxu0 %v1170
          %1204 = vmatpush1.msra.mxu0 %v1169
          %1205 = vmatprep.subr.mxu0 0.0
          %1206 = vmatpush1.msra.mxu0 0.0
          %1207 = vmatprep.subr.mxu0 0.0
          %1208 = vmatpush1.msra.mxu0 0.0
          %1209 = vmatprep.subr.mxu0 0.0
          %1210 = vmatpush1.msra.mxu0 0.0
          %1211 = vmatprep.subr.mxu0 0.0
          %1212 = vmatpush1.msra.mxu0 0.0
          %1213 = vmatprep.subr.mxu0 0.0
          %1214 = vmatpush1.msra.mxu0 0.0
          %1215 = vmatprep.subr.mxu0 0.0
          %1216 = vmatpush1.msra.mxu0 0.0
          %1217 = vmatprep.subr.mxu0 0.0
          %1218 = vmatpush1.msra.mxu0 0.0
          %1219 = vmatprep.subr.mxu0 0.0
          %1220 = vmatpush1.msra.mxu0 0.0
          %1221 = vmatprep.subr.mxu0 0.0
          %1222 = vmatpush1.msra.mxu0 0.0
          %1223 = vmatprep.subr.mxu0 0.0
          %1224 = vmatpush1.msra.mxu0 0.0
          %1225 = vmatprep.subr.mxu0 0.0
          %1226 = vmatpush1.msra.mxu0 0.0
          %1227 = vmatprep.subr.mxu0 0.0
          %1228 = vmatpush1.msra.mxu0 0.0
          %1229 = vmatprep.subr.mxu0 0.0
          %1230 = vmatpush1.msra.mxu0 0.0
          %1231 = vmatprep.subr.mxu0 0.0
          %1232 = vmatpush1.msra.mxu0 0.0
          %1233 = vmatprep.subr.mxu0 0.0
          %1234 = vmatpush1.msra.mxu0 0.0
          %1235 = vmatprep.subr.mxu0 0.0
          %1236 = vmatpush1.msra.mxu0 0.0
          %1237 = vmatprep.mubr.f32.mxu0 0.0
          %1238 = vmatmul.mubr.f32.gmra.mrb[0].mxu0 %v1171
          %v1239 = vpop.f32.mrb[0].mxu0
          %v1240 = vadd.f32 0.0, %v1239
          %v1241 = vpop.f32.mrb[0].mxu0
          %v1242 = vadd.f32 0.0, %v1241
          %1243 = vdwg.mxu0
          %v1246 = vcombine.low %v1240, %v1242
          %v1248 = vadd.f32 %v1172, %v1246
          %1249 = vst [vmem:[#allocation2] sm:$0xff] %v1248
        $region63: #{tpu_custom_call.1} parent=50 // pred_fallthru
          _
        %p1250 = scmp.eq.s32.totalorder %s36, 3
        // Predicated region
        $region64: #{tpu_custom_call.1} parent=50 // pred_check
          %p1251 = pneg %p1250
        $region65: #{tpu_custom_call.1} parent=50 // pred_check_branch
          %1253 = sbr.rel (%p1251) target = $region67
        $region66: #{tpu_custom_call.1} parent=50 // pred_region
          %v1254 = vld [vmem:[#allocation2] sm:$0xff]
          %1255 = vst [vmem:[%s340] sm:$0xff] %v1254
        $region67: #{tpu_custom_call.1} parent=50 // pred_fallthru
          _
        %s1256 = sand.u32 %s168, 1
        %s1257 = scalar_lea.sflag [#allocation8], %s1256
        %s1258 = sand.u32 %s168, 1
        %s1259 = smul.addr %s1258, 8
        %s1260 = scalar_lea.vmem [#allocation7], %s1259
        // Predicated region
        $region68: #{tpu_custom_call.1} parent=50 // pred_check
          %p1261 = pneg %p178
        $region69: #{tpu_custom_call.1} parent=50 // pred_check_branch
          %1263 = sbr.rel (%p1261) target = $region71
        $region70: #{tpu_custom_call.1} parent=50 // pred_region
          %s1264 = smul.u32 2, %s35
          %s1266 = ssub.s32 128, 128
          %1267 = vsyncadd %s1257, %s1266
          %s1268 = smul.addr %s34, 4
          %s1269 = sadd.s32 %s1264, %s1268
          %s1270 = smul.addr %s1269, 64
          %s1271 = scalar_lea.hbm %s5, %s1270
          %s1273 = sshll.u32 %s1260, 4
          %s1274 = int_to_ptr.vmem [resolvable:$true] %s1273
          %1276 = dma.vmem_to_hbm [thread:$0]  %s1274, 128, %s1271, %s1257
        $region71: #{tpu_custom_call.1} parent=50 // pred_fallthru
          _
      $region51: #{tpu_custom_call.1} parent=5 // pred_fallthru
        _
      %p1277 = scmp.le.s32.totalorder 2, %s24
      // Predicated region
      $region72: #{tpu_custom_call.1} parent=5 // pred_check
        %p1278 = pneg %p1277
      $region73: #{tpu_custom_call.1} parent=5 // pred_check_branch
        %1280 = sbr.rel (%p1278) target = $region75
      $region74: #{tpu_custom_call.1} parent=5 // pred_region
        %s1281 = ssub.s32 %s24, 2
        // Predicated region
        $region76: #{tpu_custom_call.1} parent=74 // pred_check
          %p1282 = pneg %p184
        $region77: #{tpu_custom_call.1} parent=74 // pred_check_branch
          %1284 = sbr.rel (%p1282) target = $region79
        $region78: #{tpu_custom_call.1} parent=74 // pred_region
          %s1285 = sand.u32 %s169, 1
          %s1286 = scalar_lea.sflag [#allocation8], %s1285
          %s1287 = sand.u32 %s169, 1
          %s1288 = smul.addr %s1287, 8
          %s1289 = scalar_lea.vmem [#allocation7], %s1288
          %1290 = dma.done %s1286, 128
        $region79: #{tpu_custom_call.1} parent=74 // pred_fallthru
          _
      $region75: #{tpu_custom_call.1} parent=5 // pred_fallthru
        _
    $region6: #{tpu_custom_call.1} parent=1 // loop_footer
      %s28 = sadd.s32 1, %s24
    $region7: #{tpu_custom_call.1} parent=1 // loop_footer_branch
      %23 = sbr.rel target = $region3
    $region8: #{tpu_custom_call.1} parent=1 // loop_exit
      _
    %1291 = vsyncpa [#allocation8], 1
    %s1292 = scalar_lea.sflag [#allocation8], 1
    %1293 = vsyncpa %s1292, 1

</llo_original>
